<compile_context>
chip_gen: v7x
topology: tpu7x:2x2x1
jax: 0.10.0
libtpu: 0.0.40
codegen_flags: <defaults>
</compile_context>

<pallas_src>
import numpy as np

import jax
import jax.numpy as jnp
from jax.experimental import pallas as pl
from jax.experimental.pallas import tpu as pltpu


# ----------------------------------------------------------------------------
# Fused Pallas kernel: entire ICM forward pass (both embeddings batched)
# ----------------------------------------------------------------------------

def _icm_fused_kernel(x_ref, pos_ref, act_ref,
                      c1w_ref, c1b_ref, c2w_ref, c2b_ref, c3w_ref, c3b_ref,
                      pw1_ref, pb1_ref, pw2_ref, pb2_ref,
                      iw1_ref, ib1_ref, iw2_ref, ib2_ref,
                      fw1_ref, fb1_ref, fw2_ref, fb2_ref,
                      out_ref):
    f32, bf16 = jnp.float32, jnp.bfloat16
    B = act_ref.shape[0]          # real batch (obs / obs_ stacked => 2B rows in x)
    A = act_ref.shape[1]          # number of actions
    E = fw2_ref.shape[1]          # embedding size

    def dot(a, w_ref):            # bf16 MXU matmul, f32 accumulation
        return jnp.dot(a.astype(bf16), w_ref[...], preferred_element_type=f32)

    # --- Conv2d(3,16,(2,2)) + ReLU as one dense matmul: 7x7x3 -> 6x6x16.
    #     Output columns ordered (kh, kw, pool_h, pool_w, c) so pooling below
    #     is a max of 4 contiguous lane slabs.
    h1 = jnp.maximum(dot(x_ref[...], c1w_ref) + c1b_ref[...], 0.0)      # (2B, 576)

    # --- MaxPool2d((2,2)): 6x6x16 -> 3x3x16 (pure VPU max, data stays in vregs)
    q = h1.shape[1] // 4                                                 # 144
    p1 = jnp.maximum(jnp.maximum(h1[:, 0:q], h1[:, q:2 * q]),
                     jnp.maximum(h1[:, 2 * q:3 * q], h1[:, 3 * q:4 * q]))  # (2B,144)

    # --- Conv2d(16,32,(2,2)) + ReLU: 3x3x16 -> 2x2x32 (one dense matmul)
    h2 = jnp.maximum(dot(p1, c2w_ref) + c2b_ref[...], 0.0)               # (2B, 128)

    # --- Conv2d(32,64,(2,2)) + ReLU: 2x2x32 -> 1x1x64 (patch == whole h2).
    #     PyTorch's NCHW flatten is a no-op here because spatial is 1x1.
    h3 = jnp.maximum(dot(h2, c3w_ref) + c3b_ref[...], 0.0)               # (2B, 64)

    # --- image_pos_layer: Linear(E+2, 64) -> ReLU -> Linear(64, E)
    e_in = jnp.concatenate([h3, pos_ref[...]], axis=1)                   # (2B, 66)
    t = jnp.maximum(dot(e_in, pw1_ref) + pb1_ref[...], 0.0)
    emb = dot(t, pw2_ref) + pb2_ref[...]                                 # (2B, E)

    e0 = emb[:B]                  # embeddings of obs
    e1 = emb[B:]                  # embeddings of obs_

    # --- inverse_model: Linear(2E,64) -> Tanh -> Linear(64,A) -> log_softmax
    inv_in = jnp.concatenate([e0, e1], axis=1)                           # (B, 2E)
    t = jnp.tanh(dot(inv_in, iw1_ref) + ib1_ref[...])
    logits = dot(t, iw2_ref) + ib2_ref[...]                              # (B, A)
    m = jnp.max(logits, axis=-1, keepdims=True)
    s = logits - m
    a_dist = s - jnp.log(jnp.sum(jnp.exp(s), axis=-1, keepdims=True))

    # --- forward_model: Linear(A+E,64) -> Tanh -> Linear(64,E)
    fwd_in = jnp.concatenate([e0, act_ref[...]], axis=1)                 # (B, E+A)
    t = jnp.tanh(dot(fwd_in, fw1_ref) + fb1_ref[...])
    s_pred = dot(t, fw2_ref) + fb2_ref[...]                              # (B, E)

    # --- pack lane-dense output slab: [ s_pred | a_dist | zero pad ] -> (B, 128)
    pad = jnp.zeros((B, out_ref.shape[1] - E - A), f32)
    out_ref[...] = jnp.concatenate([s_pred, a_dist, pad], axis=1)


# ----------------------------------------------------------------------------
# Parameter construction (deterministic, synthetic)
# ----------------------------------------------------------------------------

def _init_linear(key, fan_in, fan_out):
    # Matches init_params: weight ~ N(0,1) row-normalized over inputs; bias 0.
    # Stored transposed as (in, out); matmul weights kept in bf16.
    w = jax.random.normal(key, (fan_in, fan_out), jnp.float32)
    w = w / jnp.sqrt(jnp.sum(w * w, axis=0, keepdims=True))
    return w.astype(jnp.bfloat16), jnp.zeros((1, fan_out), jnp.float32)


def _init_conv(key, c_in, c_out):
    # 2x2 conv weight as (4*c_in, c_out), patch-row order (kh, kw, c_in);
    # PyTorch-default-style uniform init.
    fan_in = 4 * c_in
    bound = 1.0 / np.sqrt(float(fan_in))
    kw, kb = jax.random.split(key)
    w = jax.random.uniform(kw, (fan_in, c_out), jnp.float32, -bound, bound)
    b = jax.random.uniform(kb, (1, c_out), jnp.float32, -bound, bound)
    return w, b
    # TODO(synk): if real PyTorch Conv2d weights are ever loaded, their
    # (out, in, kh, kw) flattening must be permuted to this (kh, kw, in) order.


def _pool_major_block_index(i, j):
    # Conv1 output position (i, j) -> column-block index ordered
    # (kh, kw, pool_h, pool_w) so a 2x2/2 max-pool is 4 contiguous lane slabs.
    pi, di = i // 2, i % 2
    pj, dj = j // 2, j % 2
    return (di * 2 + dj) * 9 + (pi * 3 + pj)


def _conv2x2_as_dense(w_small, hin, win, cin, cout, out_block_index=None):
    # Expand a 2x2 / stride-1 conv into a dense (hin*win*cin, hout*wout*cout)
    # matmul weight acting on an (h, w, c)-flattened image row.
    w = np.asarray(w_small, dtype=np.float32)
    hout, wout = hin - 1, win - 1
    if out_block_index is None:
        out_block_index = lambda i, j: i * wout + j
    big = np.zeros((hin * win * cin, hout * wout * cout), np.float32)
    for i in range(hout):
        for j in range(wout):
            c0 = out_block_index(i, j) * cout
            for di in range(2):
                for dj in range(2):
                    r0 = ((i + di) * win + (j + dj)) * cin
                    ws = w[(di * 2 + dj) * cin:(di * 2 + dj + 1) * cin, :]
                    big[r0:r0 + cin, c0:c0 + cout] = ws
    return jnp.asarray(big, dtype=jnp.bfloat16)


def make_params(key, n_actions=4):
    # Fixed to obs_space['image'] = (7, 7, 3)  =>  embedding_size = 64.
    emb = 64
    ks = jax.random.split(key, 9)

    c1w, c1b = _init_conv(ks[0], 3, 16)
    c2w, c2b = _init_conv(ks[1], 16, 32)
    c3w, c3b = _init_conv(ks[2], 32, 64)

    p = {}
    # Conv1 as dense (147, 576), pool-major output ordering (see kernel).
    p["conv1_w"] = _conv2x2_as_dense(c1w, 7, 7, 3, 16,
                                     out_block_index=_pool_major_block_index)
    p["conv1_b"] = jnp.tile(c1b, (1, 36))                    # (1, 576)
    # Conv2 as dense (144, 128), natural (i, j, c) output ordering.
    p["conv2_w"] = _conv2x2_as_dense(c2w, 3, 3, 16, 32)
    p["conv2_b"] = jnp.tile(c2b, (1, 4))                     # (1, 128)
    # Conv3 on a 2x2 input is a single 2x2 patch == a plain (128, 64) matmul.
    p["conv3_w"] = c3w.astype(jnp.bfloat16)
    p["conv3_b"] = c3b                                       # (1, 64)
    # image_pos_layer: Linear(E+2, 64) -> ReLU -> Linear(64, E)
    p["pos_w1"], p["pos_b1"] = _init_linear(ks[3], emb + 2, 64)
    p["pos_w2"], p["pos_b2"] = _init_linear(ks[4], 64, emb)
    # inverse_model: Linear(2E, 64) -> Tanh -> Linear(64, A)
    p["inv_w1"], p["inv_b1"] = _init_linear(ks[5], 2 * emb, 64)
    p["inv_w2"], p["inv_b2"] = _init_linear(ks[6], 64, n_actions)
    # forward_model: Linear(A+E, 64) -> Tanh -> Linear(64, E)
    p["fwd_w1"], p["fwd_b1"] = _init_linear(ks[7], n_actions + emb, 64)
    p["fwd_w2"], p["fwd_b2"] = _init_linear(ks[8], 64, emb)
    return p


# ----------------------------------------------------------------------------
# Forward pass wrapper: one pallas_call for the whole ICM forward
# ----------------------------------------------------------------------------

def icm_forward(params, obs, obs_, action):
    # obs / obs_ = (image (B,7,7,3) NHWC, pos (B,2));  action = one-hot (B, A)
    B, H, W, C = obs[0].shape
    img = jnp.concatenate([obs[0], obs_[0]], axis=0).astype(jnp.float32)
    pos = jnp.concatenate([obs[1], obs_[1]], axis=0).astype(jnp.float32)
    x_flat = img.reshape(2 * B, H * W * C)       # NHWC row-major -> (h, w, c) lanes
    action = action.astype(jnp.float32)

    A = params["inv_w2"].shape[1]
    E = params["fwd_w2"].shape[1]
    out_lanes = 128                              # lane-dense packed output slab
    assert E + A <= out_lanes

    args = (x_flat, pos, action,
            params["conv1_w"], params["conv1_b"],
            params["conv2_w"], params["conv2_b"],
            params["conv3_w"], params["conv3_b"],
            params["pos_w1"], params["pos_b1"],
            params["pos_w2"], params["pos_b2"],
            params["inv_w1"], params["inv_b1"],
            params["inv_w2"], params["inv_b2"],
            params["fwd_w1"], params["fwd_b1"],
            params["fwd_w2"], params["fwd_b2"])

    vmem = pl.BlockSpec(memory_space=pltpu.MemorySpace.VMEM)
    packed = pl.pallas_call(
        _icm_fused_kernel,
        out_shape=jax.ShapeDtypeStruct((B, out_lanes), jnp.float32),
        in_specs=[vmem] * len(args),
        out_specs=vmem,
        compiler_params=pltpu.CompilerParams(vmem_limit_bytes=8 * 1024 * 1024),
        cost_estimate=pl.CostEstimate(flops=1_100_000, transcendentals=320,
                                      bytes_accessed=320_000),
    )(*args)

    s_pred = packed[:, :E]
    a_dist = packed[:, E:E + A]
    # TODO(synk): use_memory (LSTMCell) and use_text (GRU) branches are
    # unimplemented in the original forward as well (print + quit).
    memory = None
    return a_dist, s_pred, memory


# ----------------------------------------------------------------------------
# Main
# ----------------------------------------------------------------------------

if __name__ == "__main__":
    B, N, M, C = 2, 7, 7, 3
    N_ACTIONS = 4
    EMB = ((N - 1) // 2 - 2) * ((M - 1) // 2 - 2) * 64   # = 64

    key = jax.random.PRNGKey(0)
    k_par, k_i1, k_p1, k_i2, k_p2, k_a = jax.random.split(key, 6)

    params = make_params(k_par, n_actions=N_ACTIONS)

    obs_img = jax.random.uniform(k_i1, (B, N, M, C), jnp.float32)
    obs_pos = jax.random.uniform(k_p1, (B, 2), jnp.float32)
    obs_img_ = jax.random.uniform(k_i2, (B, N, M, C), jnp.float32)
    obs_pos_ = jax.random.uniform(k_p2, (B, 2), jnp.float32)
    act_idx = jax.random.randint(k_a, (B,), 0, N_ACTIONS)
    action = jax.nn.one_hot(act_idx, N_ACTIONS, dtype=jnp.float32)

    a_dist, s_pred, memory = jax.jit(icm_forward)(
        params, (obs_img, obs_pos), (obs_img_, obs_pos_), action)
    jax.block_until_ready((a_dist, s_pred))

    assert a_dist.shape == (B, N_ACTIONS)
    assert s_pred.shape == (B, EMB)
    print("KERNEL_OK")
</pallas_src>

<mosaic_0001>
module attributes {stable_mosaic.version = 11 : i64} {
  func.func @_icm_fused_kernel(%arg0: memref<4x147xf32, #tpu.memory_space<vmem>>, %arg1: memref<4x2xf32, #tpu.memory_space<vmem>>, %arg2: memref<2x4xf32, #tpu.memory_space<vmem>>, %arg3: memref<147x576xbf16, #tpu.memory_space<vmem>>, %arg4: memref<1x576xf32, #tpu.memory_space<vmem>>, %arg5: memref<144x128xbf16, #tpu.memory_space<vmem>>, %arg6: memref<1x128xf32, #tpu.memory_space<vmem>>, %arg7: memref<128x64xbf16, #tpu.memory_space<vmem>>, %arg8: memref<1x64xf32, #tpu.memory_space<vmem>>, %arg9: memref<66x64xbf16, #tpu.memory_space<vmem>>, %arg10: memref<1x64xf32, #tpu.memory_space<vmem>>, %arg11: memref<64x64xbf16, #tpu.memory_space<vmem>>, %arg12: memref<1x64xf32, #tpu.memory_space<vmem>>, %arg13: memref<128x64xbf16, #tpu.memory_space<vmem>>, %arg14: memref<1x64xf32, #tpu.memory_space<vmem>>, %arg15: memref<64x4xbf16, #tpu.memory_space<vmem>>, %arg16: memref<1x4xf32, #tpu.memory_space<vmem>>, %arg17: memref<68x64xbf16, #tpu.memory_space<vmem>>, %arg18: memref<1x64xf32, #tpu.memory_space<vmem>>, %arg19: memref<64x64xbf16, #tpu.memory_space<vmem>>, %arg20: memref<1x64xf32, #tpu.memory_space<vmem>>, %arg21: memref<2x128xf32, #tpu.memory_space<vmem>>) attributes {dimension_semantics = [], scalar_prefetch = 0 : i64, scratch_operands = 0 : i64, tpu.core_type = #tpu.core_type<tc>} {
    %c0 = arith.constant 0 : index
    %c0_0 = arith.constant 0 : index
    %0 = vector.load %arg0[%c0, %c0_0] : memref<4x147xf32, #tpu.memory_space<vmem>>, vector<4x147xf32>
    %1 = arith.truncf %0 : vector<4x147xf32> to vector<4x147xbf16>
    %c0_1 = arith.constant 0 : index
    %c0_2 = arith.constant 0 : index
    %2 = vector.load %arg3[%c0_1, %c0_2] : memref<147x576xbf16, #tpu.memory_space<vmem>>, vector<147x576xbf16>
    %cst = arith.constant dense<0.000000e+00> : vector<4x576xf32>
    %3 = tpu.matmul %1, %2, %cst {dimension_numbers = #tpu.dot_dimension_numbers<[1], [0], [0], [1], [0, 0, 1, 1], [], []>} : vector<4x147xbf16>, vector<147x576xbf16>, vector<4x576xf32> -> vector<4x576xf32>
    %c0_3 = arith.constant 0 : index
    %c0_4 = arith.constant 0 : index
    %4 = vector.load %arg4[%c0_3, %c0_4] : memref<1x576xf32, #tpu.memory_space<vmem>>, vector<1x576xf32>
    %5 = vector.broadcast %4 : vector<1x576xf32> to vector<4x576xf32>
    %6 = arith.addf %3, %5 : vector<4x576xf32>
    %cst_5 = arith.constant 0.000000e+00 : f32
    %7 = vector.broadcast %cst_5 : f32 to vector<4x576xf32>
    %8 = arith.maximumf %6, %7 : vector<4x576xf32>
    %9 = vector.extract_strided_slice %8 {offsets = [0, 0], sizes = [4, 144], strides = [1, 1]} : vector<4x576xf32> to vector<4x144xf32>
    %10 = vector.extract_strided_slice %8 {offsets = [0, 144], sizes = [4, 144], strides = [1, 1]} : vector<4x576xf32> to vector<4x144xf32>
    %11 = arith.maximumf %9, %10 : vector<4x144xf32>
    %12 = vector.extract_strided_slice %8 {offsets = [0, 288], sizes = [4, 144], strides = [1, 1]} : vector<4x576xf32> to vector<4x144xf32>
    %13 = vector.extract_strided_slice %8 {offsets = [0, 432], sizes = [4, 144], strides = [1, 1]} : vector<4x576xf32> to vector<4x144xf32>
    %14 = arith.maximumf %12, %13 : vector<4x144xf32>
    %15 = arith.maximumf %11, %14 : vector<4x144xf32>
    %16 = arith.truncf %15 : vector<4x144xf32> to vector<4x144xbf16>
    %c0_6 = arith.constant 0 : index
    %c0_7 = arith.constant 0 : index
    %17 = vector.load %arg5[%c0_6, %c0_7] : memref<144x128xbf16, #tpu.memory_space<vmem>>, vector<144x128xbf16>
    %cst_8 = arith.constant dense<0.000000e+00> : vector<4x128xf32>
    %18 = tpu.matmul %16, %17, %cst_8 {dimension_numbers = #tpu.dot_dimension_numbers<[1], [0], [0], [1], [0, 0, 1, 1], [], []>} : vector<4x144xbf16>, vector<144x128xbf16>, vector<4x128xf32> -> vector<4x128xf32>
    %c0_9 = arith.constant 0 : index
    %c0_10 = arith.constant 0 : index
    %19 = vector.load %arg6[%c0_9, %c0_10] : memref<1x128xf32, #tpu.memory_space<vmem>>, vector<1x128xf32>
    %20 = vector.broadcast %19 : vector<1x128xf32> to vector<4x128xf32>
    %21 = arith.addf %18, %20 : vector<4x128xf32>
    %cst_11 = arith.constant 0.000000e+00 : f32
    %22 = vector.broadcast %cst_11 : f32 to vector<4x128xf32>
    %23 = arith.maximumf %21, %22 : vector<4x128xf32>
    %24 = arith.truncf %23 : vector<4x128xf32> to vector<4x128xbf16>
    %c0_12 = arith.constant 0 : index
    %c0_13 = arith.constant 0 : index
    %25 = vector.load %arg7[%c0_12, %c0_13] : memref<128x64xbf16, #tpu.memory_space<vmem>>, vector<128x64xbf16>
    %cst_14 = arith.constant dense<0.000000e+00> : vector<4x64xf32>
    %26 = tpu.matmul %24, %25, %cst_14 {dimension_numbers = #tpu.dot_dimension_numbers<[1], [0], [0], [1], [0, 0, 1, 1], [], []>} : vector<4x128xbf16>, vector<128x64xbf16>, vector<4x64xf32> -> vector<4x64xf32>
    %c0_15 = arith.constant 0 : index
    %c0_16 = arith.constant 0 : index
    %27 = vector.load %arg8[%c0_15, %c0_16] : memref<1x64xf32, #tpu.memory_space<vmem>>, vector<1x64xf32>
    %28 = vector.broadcast %27 : vector<1x64xf32> to vector<4x64xf32>
    %29 = arith.addf %26, %28 : vector<4x64xf32>
    %cst_17 = arith.constant 0.000000e+00 : f32
    %30 = vector.broadcast %cst_17 : f32 to vector<4x64xf32>
    %31 = arith.maximumf %29, %30 : vector<4x64xf32>
    %c0_18 = arith.constant 0 : index
    %c0_19 = arith.constant 0 : index
    %32 = vector.load %arg1[%c0_18, %c0_19] : memref<4x2xf32, #tpu.memory_space<vmem>>, vector<4x2xf32>
    %33 = tpu.concatenate %31, %32 in 1 : vector<4x64xf32>, vector<4x2xf32> -> vector<4x66xf32>
    %34 = arith.truncf %33 : vector<4x66xf32> to vector<4x66xbf16>
    %c0_20 = arith.constant 0 : index
    %c0_21 = arith.constant 0 : index
    %35 = vector.load %arg9[%c0_20, %c0_21] : memref<66x64xbf16, #tpu.memory_space<vmem>>, vector<66x64xbf16>
    %cst_22 = arith.constant dense<0.000000e+00> : vector<4x64xf32>
    %36 = tpu.matmul %34, %35, %cst_22 {dimension_numbers = #tpu.dot_dimension_numbers<[1], [0], [0], [1], [0, 0, 1, 1], [], []>} : vector<4x66xbf16>, vector<66x64xbf16>, vector<4x64xf32> -> vector<4x64xf32>
    %c0_23 = arith.constant 0 : index
    %c0_24 = arith.constant 0 : index
    %37 = vector.load %arg10[%c0_23, %c0_24] : memref<1x64xf32, #tpu.memory_space<vmem>>, vector<1x64xf32>
    %38 = vector.broadcast %37 : vector<1x64xf32> to vector<4x64xf32>
    %39 = arith.addf %36, %38 : vector<4x64xf32>
    %cst_25 = arith.constant 0.000000e+00 : f32
    %40 = vector.broadcast %cst_25 : f32 to vector<4x64xf32>
    %41 = arith.maximumf %39, %40 : vector<4x64xf32>
    %42 = arith.truncf %41 : vector<4x64xf32> to vector<4x64xbf16>
    %c0_26 = arith.constant 0 : index
    %c0_27 = arith.constant 0 : index
    %43 = vector.load %arg11[%c0_26, %c0_27] : memref<64x64xbf16, #tpu.memory_space<vmem>>, vector<64x64xbf16>
    %cst_28 = arith.constant dense<0.000000e+00> : vector<4x64xf32>
    %44 = tpu.matmul %42, %43, %cst_28 {dimension_numbers = #tpu.dot_dimension_numbers<[1], [0], [0], [1], [0, 0, 1, 1], [], []>} : vector<4x64xbf16>, vector<64x64xbf16>, vector<4x64xf32> -> vector<4x64xf32>
    %c0_29 = arith.constant 0 : index
    %c0_30 = arith.constant 0 : index
    %45 = vector.load %arg12[%c0_29, %c0_30] : memref<1x64xf32, #tpu.memory_space<vmem>>, vector<1x64xf32>
    %46 = vector.broadcast %45 : vector<1x64xf32> to vector<4x64xf32>
    %47 = arith.addf %44, %46 : vector<4x64xf32>
    %48 = vector.extract_strided_slice %47 {offsets = [0, 0], sizes = [2, 64], strides = [1, 1]} : vector<4x64xf32> to vector<2x64xf32>
    %49 = vector.extract_strided_slice %47 {offsets = [2, 0], sizes = [2, 64], strides = [1, 1]} : vector<4x64xf32> to vector<2x64xf32>
    %50 = tpu.concatenate %48, %49 in 1 : vector<2x64xf32>, vector<2x64xf32> -> vector<2x128xf32>
    %51 = arith.truncf %50 : vector<2x128xf32> to vector<2x128xbf16>
    %c0_31 = arith.constant 0 : index
    %c0_32 = arith.constant 0 : index
    %52 = vector.load %arg13[%c0_31, %c0_32] : memref<128x64xbf16, #tpu.memory_space<vmem>>, vector<128x64xbf16>
    %cst_33 = arith.constant dense<0.000000e+00> : vector<2x64xf32>
    %53 = tpu.matmul %51, %52, %cst_33 {dimension_numbers = #tpu.dot_dimension_numbers<[1], [0], [0], [1], [0, 0, 1, 1], [], []>} : vector<2x128xbf16>, vector<128x64xbf16>, vector<2x64xf32> -> vector<2x64xf32>
    %c0_34 = arith.constant 0 : index
    %c0_35 = arith.constant 0 : index
    %54 = vector.load %arg14[%c0_34, %c0_35] : memref<1x64xf32, #tpu.memory_space<vmem>>, vector<1x64xf32>
    %55 = vector.broadcast %54 : vector<1x64xf32> to vector<2x64xf32>
    %56 = arith.addf %53, %55 : vector<2x64xf32>
    %57 = math.tanh %56 : vector<2x64xf32>
    %58 = arith.truncf %57 : vector<2x64xf32> to vector<2x64xbf16>
    %c0_36 = arith.constant 0 : index
    %c0_37 = arith.constant 0 : index
    %59 = vector.load %arg15[%c0_36, %c0_37] : memref<64x4xbf16, #tpu.memory_space<vmem>>, vector<64x4xbf16>
    %cst_38 = arith.constant dense<0.000000e+00> : vector<2x4xf32>
    %60 = tpu.matmul %58, %59, %cst_38 {dimension_numbers = #tpu.dot_dimension_numbers<[1], [0], [0], [1], [0, 0, 1, 1], [], []>} : vector<2x64xbf16>, vector<64x4xbf16>, vector<2x4xf32> -> vector<2x4xf32>
    %c0_39 = arith.constant 0 : index
    %c0_40 = arith.constant 0 : index
    %61 = vector.load %arg16[%c0_39, %c0_40] : memref<1x4xf32, #tpu.memory_space<vmem>>, vector<1x4xf32>
    %62 = vector.broadcast %61 : vector<1x4xf32> to vector<2x4xf32>
    %63 = arith.addf %60, %62 : vector<2x4xf32>
    %cst_41 = arith.constant dense<0xFF800000> : vector<2xf32>
    %64 = vector.multi_reduction <maximumf>, %63, %cst_41 [1] : vector<2x4xf32> to vector<2xf32>
    %65 = vector.shape_cast %64 : vector<2xf32> to vector<2x1xf32>
    %66 = vector.broadcast %65 : vector<2x1xf32> to vector<2x4xf32>
    %67 = arith.subf %63, %66 : vector<2x4xf32>
    %68 = math.exp %67 : vector<2x4xf32>
    %cst_42 = arith.constant dense<0.000000e+00> : vector<2xf32>
    %69 = vector.multi_reduction <add>, %68, %cst_42 [1] : vector<2x4xf32> to vector<2xf32>
    %70 = vector.shape_cast %69 : vector<2xf32> to vector<2x1xf32>
    %71 = math.log %70 : vector<2x1xf32>
    %72 = vector.broadcast %71 : vector<2x1xf32> to vector<2x4xf32>
    %73 = arith.subf %67, %72 : vector<2x4xf32>
    %c0_43 = arith.constant 0 : index
    %c0_44 = arith.constant 0 : index
    %74 = vector.load %arg2[%c0_43, %c0_44] : memref<2x4xf32, #tpu.memory_space<vmem>>, vector<2x4xf32>
    %75 = tpu.concatenate %48, %74 in 1 : vector<2x64xf32>, vector<2x4xf32> -> vector<2x68xf32>
    %76 = arith.truncf %75 : vector<2x68xf32> to vector<2x68xbf16>
    %c0_45 = arith.constant 0 : index
    %c0_46 = arith.constant 0 : index
    %77 = vector.load %arg17[%c0_45, %c0_46] : memref<68x64xbf16, #tpu.memory_space<vmem>>, vector<68x64xbf16>
    %cst_47 = arith.constant dense<0.000000e+00> : vector<2x64xf32>
    %78 = tpu.matmul %76, %77, %cst_47 {dimension_numbers = #tpu.dot_dimension_numbers<[1], [0], [0], [1], [0, 0, 1, 1], [], []>} : vector<2x68xbf16>, vector<68x64xbf16>, vector<2x64xf32> -> vector<2x64xf32>
    %c0_48 = arith.constant 0 : index
    %c0_49 = arith.constant 0 : index
    %79 = vector.load %arg18[%c0_48, %c0_49] : memref<1x64xf32, #tpu.memory_space<vmem>>, vector<1x64xf32>
    %80 = vector.broadcast %79 : vector<1x64xf32> to vector<2x64xf32>
    %81 = arith.addf %78, %80 : vector<2x64xf32>
    %82 = math.tanh %81 : vector<2x64xf32>
    %83 = arith.truncf %82 : vector<2x64xf32> to vector<2x64xbf16>
    %c0_50 = arith.constant 0 : index
    %c0_51 = arith.constant 0 : index
    %84 = vector.load %arg19[%c0_50, %c0_51] : memref<64x64xbf16, #tpu.memory_space<vmem>>, vector<64x64xbf16>
    %cst_52 = arith.constant dense<0.000000e+00> : vector<2x64xf32>
    %85 = tpu.matmul %83, %84, %cst_52 {dimension_numbers = #tpu.dot_dimension_numbers<[1], [0], [0], [1], [0, 0, 1, 1], [], []>} : vector<2x64xbf16>, vector<64x64xbf16>, vector<2x64xf32> -> vector<2x64xf32>
    %c0_53 = arith.constant 0 : index
    %c0_54 = arith.constant 0 : index
    %86 = vector.load %arg20[%c0_53, %c0_54] : memref<1x64xf32, #tpu.memory_space<vmem>>, vector<1x64xf32>
    %87 = vector.broadcast %86 : vector<1x64xf32> to vector<2x64xf32>
    %88 = arith.addf %85, %87 : vector<2x64xf32>
    %cst_55 = arith.constant 0.000000e+00 : f32
    %89 = vector.broadcast %cst_55 : f32 to vector<2x60xf32>
    %90 = tpu.concatenate %88, %73, %89 in 1 : vector<2x64xf32>, vector<2x4xf32>, vector<2x60xf32> -> vector<2x128xf32>
    %c0_56 = arith.constant 0 : index
    %c0_57 = arith.constant 0 : index
    %91 = vector.load %arg21[%c0_56, %c0_57] : memref<2x128xf32, #tpu.memory_space<vmem>>, vector<2x128xf32>
    tpu.vector_store %arg21[%c0_56, %c0_57], %90 {strides = array<i32>} : memref<2x128xf32, #tpu.memory_space<vmem>>, vector<2x128xf32>,
    return
  }
}

</mosaic_0001>

<llo_original>
// kernel: icm_forward.1
$region0: #{icm_forward.1}
  #allocation0 [shape = 'u32[]', space=smem, size = 0x4, offset = 0x4, fixed_abs, tag = 'smem constant byte address 0x4 - core index']
  #allocation1 [shape = 'u32[144,128]{1,0:T(1,128)}', space=vmem, size = 0x12000, scoped, tag = 'internal scratch']
  %s0 = inlined_call_operand.vmem [shape: f32[4,147], index: 0, kind: input, shape index: {}]
  %s1 = inlined_call_operand.vmem [shape: f32[4,2], index: 1, kind: input, shape index: {}]
  %s2 = inlined_call_operand.vmem [shape: f32[2,4], index: 2, kind: input, shape index: {}]
  %s3 = inlined_call_operand.vmem [shape: bf16[147,576], index: 3, kind: input, shape index: {}]
  %s4 = inlined_call_operand.vmem [shape: f32[1,576], index: 4, kind: input, shape index: {}]
  %s5 = inlined_call_operand.vmem [shape: bf16[144,128], index: 5, kind: input, shape index: {}]
  %s6 = inlined_call_operand.vmem [shape: f32[1,128], index: 6, kind: input, shape index: {}]
  %s7 = inlined_call_operand.vmem [shape: bf16[128,64], index: 7, kind: input, shape index: {}]
  %s8 = inlined_call_operand.vmem [shape: f32[1,64], index: 8, kind: input, shape index: {}]
  %s9 = inlined_call_operand.vmem [shape: bf16[66,64], index: 9, kind: input, shape index: {}]
  %s10 = inlined_call_operand.vmem [shape: f32[1,64], index: 10, kind: input, shape index: {}]
  %s11 = inlined_call_operand.vmem [shape: bf16[64,64], index: 11, kind: input, shape index: {}]
  %s12 = inlined_call_operand.vmem [shape: f32[1,64], index: 12, kind: input, shape index: {}]
  %s13 = inlined_call_operand.vmem [shape: bf16[128,64], index: 13, kind: input, shape index: {}]
  %s14 = inlined_call_operand.vmem [shape: f32[1,64], index: 14, kind: input, shape index: {}]
  %s15 = inlined_call_operand.vmem [shape: bf16[64,4], index: 15, kind: input, shape index: {}]
  %s16 = inlined_call_operand.vmem [shape: f32[1,4], index: 16, kind: input, shape index: {}]
  %s17 = inlined_call_operand.vmem [shape: bf16[68,64], index: 17, kind: input, shape index: {}]
  %s18 = inlined_call_operand.vmem [shape: f32[1,64], index: 18, kind: input, shape index: {}]
  %s19 = inlined_call_operand.vmem [shape: bf16[64,64], index: 19, kind: input, shape index: {}]
  %s20 = inlined_call_operand.vmem [shape: f32[1,64], index: 20, kind: input, shape index: {}]
  %s21 = inlined_call_operand.vmem [shape: f32[2,128], index: 21, kind: output, shape index: {}]
  %s22 = sld [smem:[#allocation0]]
  $region94: #{icm_forward.1} parent=0
    _
  %s24 = ssub.s32 1, %s22
  %s25 = scalar_select 0, %s24, %s22
  // Predicated region
  $region2: #{icm_forward.1} parent=0 // pred_check
    _
  $region3: #{icm_forward.1} parent=0 // pred_check_branch
    %27 = sbr.rel (0) target = $region5
  $region4: #{icm_forward.1} parent=0 // pred_region
    _
  $region5: #{icm_forward.1} parent=0 // pred_fallthru
    _
  // Predicated region
  $region6: #{icm_forward.1} parent=0 // pred_check
    _
  $region7: #{icm_forward.1} parent=0 // pred_check_branch
    %29 = sbr.rel (0) target = $region9
  $region8: #{icm_forward.1} parent=0 // pred_region
    _
  $region9: #{icm_forward.1} parent=0 // pred_fallthru
    _
  // Predicated region
  $region10: #{icm_forward.1} parent=0 // pred_check
    _
  $region11: #{icm_forward.1} parent=0 // pred_check_branch
    %31 = sbr.rel (0) target = $region13
  $region12: #{icm_forward.1} parent=0 // pred_region
    _
  $region13: #{icm_forward.1} parent=0 // pred_fallthru
    _
  // Predicated region
  $region14: #{icm_forward.1} parent=0 // pred_check
    _
  $region15: #{icm_forward.1} parent=0 // pred_check_branch
    %33 = sbr.rel (0) target = $region17
  $region16: #{icm_forward.1} parent=0 // pred_region
    _
  $region17: #{icm_forward.1} parent=0 // pred_fallthru
    _
  // Predicated region
  $region18: #{icm_forward.1} parent=0 // pred_check
    _
  $region19: #{icm_forward.1} parent=0 // pred_check_branch
    %35 = sbr.rel (0) target = $region21
  $region20: #{icm_forward.1} parent=0 // pred_region
    _
  $region21: #{icm_forward.1} parent=0 // pred_fallthru
    _
  // Predicated region
  $region22: #{icm_forward.1} parent=0 // pred_check
    _
  $region23: #{icm_forward.1} parent=0 // pred_check_branch
    %37 = sbr.rel (0) target = $region25
  $region24: #{icm_forward.1} parent=0 // pred_region
    _
  $region25: #{icm_forward.1} parent=0 // pred_fallthru
    _
  // Predicated region
  $region26: #{icm_forward.1} parent=0 // pred_check
    _
  $region27: #{icm_forward.1} parent=0 // pred_check_branch
    %39 = sbr.rel (0) target = $region29
  $region28: #{icm_forward.1} parent=0 // pred_region
    _
  $region29: #{icm_forward.1} parent=0 // pred_fallthru
    _
  // Predicated region
  $region30: #{icm_forward.1} parent=0 // pred_check
    _
  $region31: #{icm_forward.1} parent=0 // pred_check_branch
    %41 = sbr.rel (0) target = $region33
  $region32: #{icm_forward.1} parent=0 // pred_region
    _
  $region33: #{icm_forward.1} parent=0 // pred_fallthru
    _
  // Predicated region
  $region34: #{icm_forward.1} parent=0 // pred_check
    _
  $region35: #{icm_forward.1} parent=0 // pred_check_branch
    %43 = sbr.rel (0) target = $region37
  $region36: #{icm_forward.1} parent=0 // pred_region
    _
  $region37: #{icm_forward.1} parent=0 // pred_fallthru
    _
  // Predicated region
  $region38: #{icm_forward.1} parent=0 // pred_check
    _
  $region39: #{icm_forward.1} parent=0 // pred_check_branch
    %45 = sbr.rel (0) target = $region41
  $region40: #{icm_forward.1} parent=0 // pred_region
    _
  $region41: #{icm_forward.1} parent=0 // pred_fallthru
    _
  // Predicated region
  $region42: #{icm_forward.1} parent=0 // pred_check
    _
  $region43: #{icm_forward.1} parent=0 // pred_check_branch
    %47 = sbr.rel (0) target = $region45
  $region44: #{icm_forward.1} parent=0 // pred_region
    _
  $region45: #{icm_forward.1} parent=0 // pred_fallthru
    _
  // Predicated region
  $region46: #{icm_forward.1} parent=0 // pred_check
    _
  $region47: #{icm_forward.1} parent=0 // pred_check_branch
    %49 = sbr.rel (0) target = $region49
  $region48: #{icm_forward.1} parent=0 // pred_region
    _
  $region49: #{icm_forward.1} parent=0 // pred_fallthru
    _
  // Predicated region
  $region50: #{icm_forward.1} parent=0 // pred_check
    _
  $region51: #{icm_forward.1} parent=0 // pred_check_branch
    %51 = sbr.rel (0) target = $region53
  $region52: #{icm_forward.1} parent=0 // pred_region
    _
  $region53: #{icm_forward.1} parent=0 // pred_fallthru
    _
  // Predicated region
  $region54: #{icm_forward.1} parent=0 // pred_check
    _
  $region55: #{icm_forward.1} parent=0 // pred_check_branch
    %53 = sbr.rel (0) target = $region57
  $region56: #{icm_forward.1} parent=0 // pred_region
    _
  $region57: #{icm_forward.1} parent=0 // pred_fallthru
    _
  // Predicated region
  $region58: #{icm_forward.1} parent=0 // pred_check
    _
  $region59: #{icm_forward.1} parent=0 // pred_check_branch
    %55 = sbr.rel (0) target = $region61
  $region60: #{icm_forward.1} parent=0 // pred_region
    _
  $region61: #{icm_forward.1} parent=0 // pred_fallthru
    _
  // Predicated region
  $region62: #{icm_forward.1} parent=0 // pred_check
    _
  $region63: #{icm_forward.1} parent=0 // pred_check_branch
    %57 = sbr.rel (0) target = $region65
  $region64: #{icm_forward.1} parent=0 // pred_region
    _
  $region65: #{icm_forward.1} parent=0 // pred_fallthru
    _
  // Predicated region
  $region66: #{icm_forward.1} parent=0 // pred_check
    _
  $region67: #{icm_forward.1} parent=0 // pred_check_branch
    %59 = sbr.rel (0) target = $region69
  $region68: #{icm_forward.1} parent=0 // pred_region
    _
  $region69: #{icm_forward.1} parent=0 // pred_fallthru
    _
  // Predicated region
  $region70: #{icm_forward.1} parent=0 // pred_check
    _
  $region71: #{icm_forward.1} parent=0 // pred_check_branch
    %61 = sbr.rel (0) target = $region73
  $region72: #{icm_forward.1} parent=0 // pred_region
    _
  $region73: #{icm_forward.1} parent=0 // pred_fallthru
    _
  // Predicated region
  $region74: #{icm_forward.1} parent=0 // pred_check
    _
  $region75: #{icm_forward.1} parent=0 // pred_check_branch
    %63 = sbr.rel (0) target = $region77
  $region76: #{icm_forward.1} parent=0 // pred_region
    _
  $region77: #{icm_forward.1} parent=0 // pred_fallthru
    _
  // Predicated region
  $region78: #{icm_forward.1} parent=0 // pred_check
    _
  $region79: #{icm_forward.1} parent=0 // pred_check_branch
    %65 = sbr.rel (0) target = $region81
  $region80: #{icm_forward.1} parent=0 // pred_region
    _
  $region81: #{icm_forward.1} parent=0 // pred_fallthru
    _
  // Predicated region
  $region82: #{icm_forward.1} parent=0 // pred_check
    _
  $region83: #{icm_forward.1} parent=0 // pred_check_branch
    %67 = sbr.rel (0) target = $region85
  $region84: #{icm_forward.1} parent=0 // pred_region
    _
  $region85: #{icm_forward.1} parent=0 // pred_fallthru
    _
  %v69 = vld [vmem:[%s0] sm:$0xff]
  %v71 = vcombine.high %v69, %v69
  %v73 = vpack.c.bf16 %v69, %v69
  %v74 = vpack.c.bf16 %v71, %v71
  %v75 = vld [vmem:[%s3] sm:$0xff]
  %v76 = vld [vmem:[%s3 + $0x8] sm:$0xff]
  %v77 = vld [vmem:[%s3 + $0x10] sm:$0xf]
  %v78 = vld [vmem:[%s3 + $0x14] sm:$0xff]
  %v79 = vld [vmem:[%s3 + $0x1c] sm:$0xff]
  %v80 = vld [vmem:[%s3 + $0x24] sm:$0xf]
  %v81 = vld [vmem:[%s3 + $0x28] sm:$0xff]
  %v82 = vld [vmem:[%s3 + $0x30] sm:$0xff]
  %v83 = vld [vmem:[%s3 + $0x38] sm:$0xf]
  %v84 = vld [vmem:[%s3 + $0x3c] sm:$0xff]
  %v85 = vld [vmem:[%s3 + $0x44] sm:$0xff]
  %v86 = vld [vmem:[%s3 + $0x4c] sm:$0xf]
  %v87 = vld [vmem:[%s3 + $0x50] sm:$0xff]
  %v88 = vld [vmem:[%s3 + $0x58] sm:$0xff]
  %v89 = vld [vmem:[%s3 + $0x60] sm:$0xf]
  %v90 = vld [vmem:[%s3 + $0x64] sm:$0xff]
  %v91 = vld [vmem:[%s3 + $0x6c] sm:$0xff]
  %v92 = vld [vmem:[%s3 + $0x74] sm:$0xf]
  %v93 = vld [vmem:[%s3 + $0x78] sm:$0xff]
  %v94 = vld [vmem:[%s3 + $0x80] sm:$0xff]
  %v95 = vld [vmem:[%s3 + $0x88] sm:$0xf]
  %v96 = vld [vmem:[%s3 + $0x8c] sm:$0xff]
  %v97 = vld [vmem:[%s3 + $0x94] sm:$0xff]
  %v98 = vld [vmem:[%s3 + $0x9c] sm:$0xf]
  %v99 = vld [vmem:[%s3 + $0xa0] sm:$0xff]
  %v100 = vld [vmem:[%s3 + $0xa8] sm:$0xff]
  %v101 = vld [vmem:[%s3 + $0xb0] sm:$0xf]
  %v102 = vld [vmem:[%s3 + $0xb4] sm:$0xff]
  %v103 = vld [vmem:[%s3 + $0xbc] sm:$0xff]
  %v104 = vld [vmem:[%s3 + $0xc4] sm:$0xf]
  %v105 = vld [vmem:[%s3 + $0xc8] sm:$0xff]
  %v106 = vld [vmem:[%s3 + $0xd0] sm:$0xff]
  %v107 = vld [vmem:[%s3 + $0xd8] sm:$0xf]
  %v108 = vld [vmem:[%s3 + $0xdc] sm:$0xff]
  %v109 = vld [vmem:[%s3 + $0xe4] sm:$0xff]
  %v110 = vld [vmem:[%s3 + $0xec] sm:$0xf]
  %v111 = vld [vmem:[%s3 + $0xf0] sm:$0xff]
  %v112 = vld [vmem:[%s3 + $0xf8] sm:$0xff]
  %v113 = vld [vmem:[%s3 + $0x100] sm:$0xf]
  %v114 = vld [vmem:[%s3 + $0x104] sm:$0xff]
  %v115 = vld [vmem:[%s3 + $0x10c] sm:$0xff]
  %v116 = vld [vmem:[%s3 + $0x114] sm:$0xf]
  %v117 = vld [vmem:[%s3 + $0x118] sm:$0xff]
  %v118 = vld [vmem:[%s3 + $0x120] sm:$0xff]
  %v119 = vld [vmem:[%s3 + $0x128] sm:$0xf]
  %v120 = vld [vmem:[%s3 + $0x12c] sm:$0xff]
  %v121 = vld [vmem:[%s3 + $0x134] sm:$0xff]
  %v122 = vld [vmem:[%s3 + $0x13c] sm:$0xf]
  %v123 = vld [vmem:[%s3 + $0x140] sm:$0xff]
  %v124 = vld [vmem:[%s3 + $0x148] sm:$0xff]
  %v125 = vld [vmem:[%s3 + $0x150] sm:$0xf]
  %v126 = vld [vmem:[%s3 + $0x154] sm:$0xff]
  %v127 = vld [vmem:[%s3 + $0x15c] sm:$0xff]
  %v128 = vld [vmem:[%s3 + $0x164] sm:$0xf]
  %v129 = vld [vmem:[%s3 + $0x168] sm:$0x33]
  %v130 = vld [vmem:[%s3 + $0x170] sm:$0x33]
  %v131 = vld [vmem:[%s3 + $0x178] sm:$0x3]
  %v132 = vld [vmem:[%s4] sm:$0x1f]
  %v134 = vlaneseq
  %v135 = vshrl.u32 %v134, 7
  %v136 = vsub.s32 0, %v135
  %v137 = vrot.slane %v132, %v136
  %v138 = vlaneseq
  %v139 = vshrl.u32 %v138, 7
  %v140 = vsub.s32 1, %v139
  %v141 = vrot.slane %v132, %v140
  %v142 = vlaneseq
  %v143 = vshrl.u32 %v142, 7
  %v144 = vsub.s32 2, %v143
  %v145 = vrot.slane %v132, %v144
  %v146 = vlaneseq
  %v147 = vshrl.u32 %v146, 7
  %v148 = vsub.s32 3, %v147
  %v149 = vrot.slane %v132, %v148
  %v150 = vlaneseq
  %v151 = vshrl.u32 %v150, 7
  %v152 = vsub.s32 4, %v151
  %v153 = vrot.slane %v132, %v152
  %v216 = vunpack.c.l.b16 %v75
  %v217 = vunpack.c.h.b16 %v75
  %v218 = vunpack.c.l.b16 %v76
  %v219 = vunpack.c.h.b16 %v76
  %v220 = vunpack.c.l.b16 %v77
  %v221 = vunpack.c.l.b16 %v78
  %v222 = vunpack.c.h.b16 %v78
  %v223 = vunpack.c.l.b16 %v79
  %v224 = vunpack.c.h.b16 %v79
  %v225 = vunpack.c.l.b16 %v80
  %v226 = vunpack.c.l.b16 %v81
  %v227 = vunpack.c.h.b16 %v81
  %v228 = vunpack.c.l.b16 %v82
  %v229 = vunpack.c.h.b16 %v82
  %v230 = vunpack.c.l.b16 %v83
  %v231 = vunpack.c.l.b16 %v84
  %v232 = vunpack.c.h.b16 %v84
  %v233 = vunpack.c.l.b16 %v85
  %v234 = vunpack.c.h.b16 %v85
  %v235 = vunpack.c.l.b16 %v86
  %v236 = vunpack.c.l.b16 %v87
  %v237 = vunpack.c.h.b16 %v87
  %v238 = vunpack.c.l.b16 %v88
  %v239 = vunpack.c.h.b16 %v88
  %v240 = vunpack.c.l.b16 %v89
  %v241 = vunpack.c.l.b16 %v90
  %v242 = vunpack.c.h.b16 %v90
  %v243 = vunpack.c.l.b16 %v91
  %v244 = vunpack.c.h.b16 %v91
  %v245 = vunpack.c.l.b16 %v92
  %v246 = vunpack.c.l.b16 %v93
  %v247 = vunpack.c.h.b16 %v93
  %v248 = vunpack.c.l.b16 %v94
  %v249 = vunpack.c.h.b16 %v94
  %v250 = vunpack.c.l.b16 %v95
  %v251 = vunpack.c.l.b16 %v96
  %v252 = vunpack.c.h.b16 %v96
  %v253 = vunpack.c.l.b16 %v97
  %v254 = vunpack.c.h.b16 %v97
  %v255 = vunpack.c.l.b16 %v98
  %v256 = vunpack.c.l.b16 %v99
  %v257 = vunpack.c.h.b16 %v99
  %v258 = vunpack.c.l.b16 %v100
  %v259 = vunpack.c.h.b16 %v100
  %v260 = vunpack.c.l.b16 %v101
  %v261 = vunpack.c.l.b16 %v102
  %v262 = vunpack.c.h.b16 %v102
  %v263 = vunpack.c.l.b16 %v103
  %v264 = vunpack.c.h.b16 %v103
  %v265 = vunpack.c.l.b16 %v104
  %v266 = vunpack.c.l.b16 %v105
  %v267 = vunpack.c.h.b16 %v105
  %v268 = vunpack.c.l.b16 %v106
  %v269 = vunpack.c.h.b16 %v106
  %v270 = vunpack.c.l.b16 %v107
  %v271 = vunpack.c.l.b16 %v108
  %v272 = vunpack.c.h.b16 %v108
  %v273 = vunpack.c.l.b16 %v109
  %v274 = vunpack.c.h.b16 %v109
  %v275 = vunpack.c.l.b16 %v110
  %v276 = vunpack.c.l.b16 %v111
  %v277 = vunpack.c.h.b16 %v111
  %v278 = vunpack.c.l.b16 %v112
  %v279 = vunpack.c.h.b16 %v112
  %v280 = vunpack.c.l.b16 %v113
  %v281 = vunpack.c.l.b16 %v114
  %v282 = vunpack.c.h.b16 %v114
  %v283 = vunpack.c.l.b16 %v115
  %v284 = vunpack.c.h.b16 %v115
  %v285 = vunpack.c.l.b16 %v116
  %v286 = vunpack.c.l.b16 %v117
  %v287 = vunpack.c.h.b16 %v117
  %v288 = vunpack.c.l.b16 %v118
  %v289 = vunpack.c.h.b16 %v118
  %v290 = vunpack.c.l.b16 %v119
  %v291 = vunpack.c.l.b16 %v120
  %v292 = vunpack.c.h.b16 %v120
  %v293 = vunpack.c.l.b16 %v121
  %v294 = vunpack.c.h.b16 %v121
  %v295 = vunpack.c.l.b16 %v122
  %v296 = vunpack.c.l.b16 %v123
  %v297 = vunpack.c.h.b16 %v123
  %v298 = vunpack.c.l.b16 %v124
  %v299 = vunpack.c.h.b16 %v124
  %v300 = vunpack.c.l.b16 %v125
  %v301 = vunpack.c.l.b16 %v126
  %v302 = vunpack.c.h.b16 %v126
  %v303 = vunpack.c.l.b16 %v127
  %v304 = vunpack.c.h.b16 %v127
  %v305 = vunpack.c.l.b16 %v128
  %v306 = vunpack.c.l.b16 %v129
  %v307 = vunpack.c.h.b16 %v129
  %v308 = vunpack.c.l.b16 %v130
  %v309 = vunpack.c.h.b16 %v130
  %v310 = vunpack.c.l.b16 %v131
  %v311 = vpack.c.b16 %v221, %v216
  %v312 = vpack.c.b16 %v222, %v217
  %v313 = vpack.c.b16 %v223, %v218
  %v314 = vpack.c.b16 %v224, %v219
  %v315 = vpack.c.b16 %v225, %v220
  %v316 = vpack.c.b16 %v231, %v226
  %v317 = vpack.c.b16 %v232, %v227
  %v318 = vpack.c.b16 %v233, %v228
  %v319 = vpack.c.b16 %v234, %v229
  %v320 = vpack.c.b16 %v235, %v230
  %v321 = vpack.c.b16 %v241, %v236
  %v322 = vpack.c.b16 %v242, %v237
  %v323 = vpack.c.b16 %v243, %v238
  %v324 = vpack.c.b16 %v244, %v239
  %v325 = vpack.c.b16 %v245, %v240
  %v326 = vpack.c.b16 %v251, %v246
  %v327 = vpack.c.b16 %v252, %v247
  %v328 = vpack.c.b16 %v253, %v248
  %v329 = vpack.c.b16 %v254, %v249
  %v330 = vpack.c.b16 %v255, %v250
  %v331 = vpack.c.b16 %v261, %v256
  %v332 = vpack.c.b16 %v262, %v257
  %v333 = vpack.c.b16 %v263, %v258
  %v334 = vpack.c.b16 %v264, %v259
  %v335 = vpack.c.b16 %v265, %v260
  %v336 = vpack.c.b16 %v271, %v266
  %v337 = vpack.c.b16 %v272, %v267
  %v338 = vpack.c.b16 %v273, %v268
  %v339 = vpack.c.b16 %v274, %v269
  %v340 = vpack.c.b16 %v275, %v270
  %v341 = vpack.c.b16 %v281, %v276
  %v342 = vpack.c.b16 %v282, %v277
  %v343 = vpack.c.b16 %v283, %v278
  %v344 = vpack.c.b16 %v284, %v279
  %v345 = vpack.c.b16 %v285, %v280
  %v346 = vpack.c.b16 %v291, %v286
  %v347 = vpack.c.b16 %v292, %v287
  %v348 = vpack.c.b16 %v293, %v288
  %v349 = vpack.c.b16 %v294, %v289
  %v350 = vpack.c.b16 %v295, %v290
  %v351 = vpack.c.b16 %v301, %v296
  %v352 = vpack.c.b16 %v302, %v297
  %v353 = vpack.c.b16 %v303, %v298
  %v354 = vpack.c.b16 %v304, %v299
  %v355 = vpack.c.b16 %v305, %v300
  %v356 = vpack.c.b16 %v306, %v306
  %v357 = vpack.c.b16 %v307, %v307
  %v358 = vpack.c.b16 %v308, %v308
  %v359 = vpack.c.b16 %v309, %v309
  %v360 = vpack.c.b16 %v310, %v310
  %vm406 = vcmask 154624
  %v408 = vsel %vm406, %v74, 0
  %vm410 = vcmask 1040384
  %vm411 = vcmask 1041408
  %v412 = vsel %vm410, 4294967295, 65535
  %v413 = vsel %vm411, %v412, 0
  %v415 = vand.u32 %v356, %v413
  %v418 = vand.u32 %v357, %v413
  %v421 = vand.u32 %v358, %v413
  %v424 = vand.u32 %v359, %v413
  %v427 = vand.u32 %v360, %v413
  %429 = vmatprep.subr.bf16.mxu0 %v312
  %430 = vmatpush1.bf16.msra.mxu0 %v311
  %431 = vmatprep.subr.bf16.mxu0 %v317
  %432 = vmatpush1.bf16.msra.mxu0 %v316
  %433 = vmatprep.subr.bf16.mxu0 %v322
  %434 = vmatpush1.bf16.msra.mxu0 %v321
  %435 = vmatprep.subr.bf16.mxu0 %v327
  %436 = vmatpush1.bf16.msra.mxu0 %v326
  %437 = vmatprep.subr.bf16.mxu0 %v332
  %438 = vmatpush1.bf16.msra.mxu0 %v331
  %439 = vmatprep.subr.bf16.mxu0 %v337
  %440 = vmatpush1.bf16.msra.mxu0 %v336
  %441 = vmatprep.subr.bf16.mxu0 %v342
  %442 = vmatpush1.bf16.msra.mxu0 %v341
  %443 = vmatprep.subr.bf16.mxu0 %v347
  %444 = vmatpush1.bf16.msra.mxu0 %v346
  %445 = vmatprep.subr.bf16.mxu0 %v352
  %446 = vmatpush1.bf16.msra.mxu0 %v351
  %447 = vmatprep.subr.bf16.mxu0 %v418
  %448 = vmatpush1.bf16.msra.mxu0 %v415
  %449 = vmatprep.subr.bf16.mxu0 0
  %450 = vmatpush1.bf16.msra.mxu0 0
  %451 = vmatprep.subr.bf16.mxu0 0
  %452 = vmatpush1.bf16.msra.mxu0 0
  %453 = vmatprep.subr.bf16.mxu0 0
  %454 = vmatpush1.bf16.msra.mxu0 0
  %455 = vmatprep.subr.bf16.mxu0 0
  %456 = vmatpush1.bf16.msra.mxu0 0
  %457 = vmatprep.subr.bf16.mxu0 0
  %458 = vmatpush1.bf16.msra.mxu0 0
  %459 = vmatprep.subr.bf16.mxu0 0
  %460 = vmatpush1.bf16.msra.mxu0 0
  %461 = vmatprep.mubr.bf16.mxu0 %v408
  %462 = vmatmul.mubr.bf16.gmra.mrb[0].mxu0 %v73
  %v463 = vpop.f32.mrb[0].mxu0
  %v464 = vadd.f32 %v137, %v463
  %v465 = vpop.f32.mrb[0].mxu0
  %v466 = vadd.f32 %v141, %v465
  %v467 = vpop.f32.mrb[0].mxu0
  %v468 = vpop.f32.mrb[0].mxu0
  %469 = vdwg.mxu0
  %470 = vmatprep.subr.bf16.mxu0 %v314
  %471 = vmatpush1.bf16.msra.mxu0 %v313
  %472 = vmatprep.subr.bf16.mxu0 %v319
  %473 = vmatpush1.bf16.msra.mxu0 %v318
  %474 = vmatprep.subr.bf16.mxu0 %v324
  %475 = vmatpush1.bf16.msra.mxu0 %v323
  %476 = vmatprep.subr.bf16.mxu0 %v329
  %477 = vmatpush1.bf16.msra.mxu0 %v328
  %478 = vmatprep.subr.bf16.mxu0 %v334
  %479 = vmatpush1.bf16.msra.mxu0 %v333
  %480 = vmatprep.subr.bf16.mxu0 %v339
  %481 = vmatpush1.bf16.msra.mxu0 %v338
  %482 = vmatprep.subr.bf16.mxu0 %v344
  %483 = vmatpush1.bf16.msra.mxu0 %v343
  %484 = vmatprep.subr.bf16.mxu0 %v349
  %485 = vmatpush1.bf16.msra.mxu0 %v348
  %486 = vmatprep.subr.bf16.mxu0 %v354
  %487 = vmatpush1.bf16.msra.mxu0 %v353
  %488 = vmatprep.subr.bf16.mxu0 %v424
  %489 = vmatpush1.bf16.msra.mxu0 %v421
  %490 = vmatprep.subr.bf16.mxu0 0
  %491 = vmatpush1.bf16.msra.mxu0 0
  %492 = vmatprep.subr.bf16.mxu0 0
  %493 = vmatpush1.bf16.msra.mxu0 0
  %494 = vmatprep.subr.bf16.mxu0 0
  %495 = vmatpush1.bf16.msra.mxu0 0
  %496 = vmatprep.subr.bf16.mxu0 0
  %497 = vmatpush1.bf16.msra.mxu0 0
  %498 = vmatprep.subr.bf16.mxu0 0
  %499 = vmatpush1.bf16.msra.mxu0 0
  %500 = vmatprep.subr.bf16.mxu0 0
  %501 = vmatpush1.bf16.msra.mxu0 0
  %502 = vmatprep.mubr.bf16.mxu0 %v408
  %503 = vmatmul.mubr.bf16.gmra.mrb[0].mxu0 %v73
  %v504 = vpop.f32.mrb[0].mxu0
  %v505 = vadd.f32 %v145, %v504
  %v506 = vpop.f32.mrb[0].mxu0
  %v507 = vadd.f32 %v149, %v506
  %v508 = vpop.f32.mrb[0].mxu0
  %v509 = vpop.f32.mrb[0].mxu0
  %510 = vdwg.mxu0
  %511 = vmatprep.subr.bf16.mxu0 0
  %512 = vmatpush1.bf16.msra.mxu0 %v315
  %513 = vmatprep.subr.bf16.mxu0 0
  %514 = vmatpush1.bf16.msra.mxu0 %v320
  %515 = vmatprep.subr.bf16.mxu0 0
  %516 = vmatpush1.bf16.msra.mxu0 %v325
  %517 = vmatprep.subr.bf16.mxu0 0
  %518 = vmatpush1.bf16.msra.mxu0 %v330
  %519 = vmatprep.subr.bf16.mxu0 0
  %520 = vmatpush1.bf16.msra.mxu0 %v335
  %521 = vmatprep.subr.bf16.mxu0 0
  %522 = vmatpush1.bf16.msra.mxu0 %v340
  %523 = vmatprep.subr.bf16.mxu0 0
  %524 = vmatpush1.bf16.msra.mxu0 %v345
  %525 = vmatprep.subr.bf16.mxu0 0
  %526 = vmatpush1.bf16.msra.mxu0 %v350
  %527 = vmatprep.subr.bf16.mxu0 0
  %528 = vmatpush1.bf16.msra.mxu0 %v355
  %529 = vmatprep.subr.bf16.mxu0 0
  %530 = vmatpush1.bf16.msra.mxu0 %v427
  %531 = vmatprep.subr.bf16.mxu0 0
  %532 = vmatpush1.bf16.msra.mxu0 0
  %533 = vmatprep.subr.bf16.mxu0 0
  %534 = vmatpush1.bf16.msra.mxu0 0
  %535 = vmatprep.subr.bf16.mxu0 0
  %536 = vmatpush1.bf16.msra.mxu0 0
  %537 = vmatprep.subr.bf16.mxu0 0
  %538 = vmatpush1.bf16.msra.mxu0 0
  %539 = vmatprep.subr.bf16.mxu0 0
  %540 = vmatpush1.bf16.msra.mxu0 0
  %541 = vmatprep.subr.bf16.mxu0 0
  %542 = vmatpush1.bf16.msra.mxu0 0
  %543 = vmatprep.mubr.bf16.mxu0 %v408
  %544 = vmatmul.mubr.bf16.gmra.mrb[0].mxu0 %v73
  %v545 = vpop.f32.mrb[0].mxu0
  %v546 = vadd.f32 %v153, %v545
  %v547 = vpop.f32.mrb[0].mxu0
  %v548 = vpop.f32.mrb[0].mxu0
  %v549 = vpop.f32.mrb[0].mxu0
  %550 = vdwg.mxu0
  %v551 = vmax.f32 %v464, 0.0
  %v552 = vmax.f32 %v466, 0.0
  %v553 = vmax.f32 %v505, 0.0
  %v554 = vmax.f32 %v507, 0.0
  %v555 = vmax.f32 %v546, 0.0
  %558 = vrot.lane.b32.xlu0 %v552, 112
  %v559 = vpop.permute.xlu0 %558
  %560 = vrot.lane.b32.xlu0 %v553, 112
  %v561 = vpop.permute.xlu0 %560
  %vm562 = vcmask 916480
  %v563 = vsel %vm562, %v559, %v561
  %v566 = vmax.f32 %v551, %v563
  %v567 = vmax.f32 %v552, %v561
  %570 = vrot.lane.b32.xlu0 %v554, 112
  %v571 = vpop.permute.xlu0 %570
  %572 = vrot.lane.b32.xlu0 %v555, 112
  %v573 = vpop.permute.xlu0 %572
  %v574 = vsel %vm562, %v571, %v573
  %v577 = vmax.f32 %v553, %v574
  %v578 = vmax.f32 %v554, %v573
  %581 = vrot.lane.b32.xlu0 %v577, 96
  %v582 = vpop.permute.xlu0 %581
  %583 = vrot.lane.b32.xlu0 %v578, 96
  %v584 = vpop.permute.xlu0 %583
  %vm585 = vcmask 785408
  %v586 = vsel %vm585, %v582, %v584
  %v589 = vmax.f32 %v566, %v586
  %v590 = vmax.f32 %v567, %v584
  %v591 = vpack.c.bf16 %v589, %v589
  %v592 = vpack.c.bf16 %v590, %v590
  %v593 = vld [vmem:[%s5] sm:$0xf]
  %v594 = vld [vmem:[%s5 + $0x4] sm:$0xf]
  %v595 = vld [vmem:[%s5 + $0x8] sm:$0xf]
  %v596 = vld [vmem:[%s5 + $0xc] sm:$0xf]
  %v597 = vld [vmem:[%s5 + $0x10] sm:$0xf]
  %v598 = vld [vmem:[%s5 + $0x14] sm:$0xf]
  %v599 = vld [vmem:[%s5 + $0x18] sm:$0xf]
  %v600 = vld [vmem:[%s5 + $0x1c] sm:$0xf]
  %v601 = vld [vmem:[%s5 + $0x20] sm:$0xf]
  %v602 = vld [vmem:[%s5 + $0x24] sm:$0xf]
  %v603 = vld [vmem:[%s5 + $0x28] sm:$0xf]
  %v604 = vld [vmem:[%s5 + $0x2c] sm:$0xf]
  %v605 = vld [vmem:[%s5 + $0x30] sm:$0xf]
  %v606 = vld [vmem:[%s5 + $0x34] sm:$0xf]
  %v607 = vld [vmem:[%s5 + $0x38] sm:$0xf]
  %v608 = vld [vmem:[%s5 + $0x3c] sm:$0xf]
  %v609 = vld [vmem:[%s5 + $0x40] sm:$0xf]
  %v610 = vld [vmem:[%s5 + $0x44] sm:$0xf]
  %v611 = vld [vmem:[%s6] sm:$0x1]
  %v613 = vlaneseq
  %v614 = vshrl.u32 %v613, 7
  %v615 = vsub.s32 0, %v614
  %v616 = vrot.slane %v611, %v615
  %v636 = vunpack.c.l.b16 %v593
  %v637 = vunpack.c.l.b16 %v594
  %v638 = vunpack.c.l.b16 %v595
  %v639 = vunpack.c.l.b16 %v596
  %v640 = vunpack.c.l.b16 %v597
  %v641 = vunpack.c.l.b16 %v598
  %v642 = vunpack.c.l.b16 %v599
  %v643 = vunpack.c.l.b16 %v600
  %v644 = vunpack.c.l.b16 %v601
  %v645 = vunpack.c.l.b16 %v602
  %v646 = vunpack.c.l.b16 %v603
  %v647 = vunpack.c.l.b16 %v604
  %v648 = vunpack.c.l.b16 %v605
  %v649 = vunpack.c.l.b16 %v606
  %v650 = vunpack.c.l.b16 %v607
  %v651 = vunpack.c.l.b16 %v608
  %v652 = vunpack.c.l.b16 %v609
  %v653 = vunpack.c.l.b16 %v610
  %v654 = vpack.c.b16 %v637, %v636
  %v655 = vpack.c.b16 %v639, %v638
  %v656 = vpack.c.b16 %v641, %v640
  %v657 = vpack.c.b16 %v643, %v642
  %v658 = vpack.c.b16 %v645, %v644
  %v659 = vpack.c.b16 %v647, %v646
  %v660 = vpack.c.b16 %v649, %v648
  %v661 = vpack.c.b16 %v651, %v650
  %v662 = vpack.c.b16 %v653, %v652
  %vm672 = vcmask 130048
  %v674 = vsel %vm672, %v592, 0
  %676 = vmatprep.subr.bf16.mxu0 0
  %677 = vmatpush1.bf16.msra.mxu0 %v654
  %678 = vmatprep.subr.bf16.mxu0 0
  %679 = vmatpush1.bf16.msra.mxu0 %v655
  %680 = vmatprep.subr.bf16.mxu0 0
  %681 = vmatpush1.bf16.msra.mxu0 %v656
  %682 = vmatprep.subr.bf16.mxu0 0
  %683 = vmatpush1.bf16.msra.mxu0 %v657
  %684 = vmatprep.subr.bf16.mxu0 0
  %685 = vmatpush1.bf16.msra.mxu0 %v658
  %686 = vmatprep.subr.bf16.mxu0 0
  %687 = vmatpush1.bf16.msra.mxu0 %v659
  %688 = vmatprep.subr.bf16.mxu0 0
  %689 = vmatpush1.bf16.msra.mxu0 %v660
  %690 = vmatprep.subr.bf16.mxu0 0
  %691 = vmatpush1.bf16.msra.mxu0 %v661
  %692 = vmatprep.subr.bf16.mxu0 0
  %693 = vmatpush1.bf16.msra.mxu0 %v662
  %694 = vmatprep.subr.bf16.mxu0 0
  %695 = vmatpush1.bf16.msra.mxu0 0
  %696 = vmatprep.subr.bf16.mxu0 0
  %697 = vmatpush1.bf16.msra.mxu0 0
  %698 = vmatprep.subr.bf16.mxu0 0
  %699 = vmatpush1.bf16.msra.mxu0 0
  %700 = vmatprep.subr.bf16.mxu0 0
  %701 = vmatpush1.bf16.msra.mxu0 0
  %702 = vmatprep.subr.bf16.mxu0 0
  %703 = vmatpush1.bf16.msra.mxu0 0
  %704 = vmatprep.subr.bf16.mxu0 0
  %705 = vmatpush1.bf16.msra.mxu0 0
  %706 = vmatprep.subr.bf16.mxu0 0
  %707 = vmatpush1.bf16.msra.mxu0 0
  %708 = vmatprep.mubr.bf16.mxu0 %v674
  %709 = vmatmul.mubr.bf16.gmra.mrb[0].mxu0 %v591
  %v710 = vpop.f32.mrb[0].mxu0
  %v711 = vadd.f32 %v616, %v710
  %v712 = vpop.f32.mrb[0].mxu0
  %v713 = vpop.f32.mrb[0].mxu0
  %v714 = vpop.f32.mrb[0].mxu0
  %715 = vdwg.mxu0
  %v716 = vmax.f32 %v711, 0.0
  %v717 = vpack.c.bf16 %v716, %v716
  %v718 = vld [vmem:[%s7] sm:$0xf]
  %v719 = vld [vmem:[%s7 + $0x4] sm:$0xf]
  %v720 = vld [vmem:[%s7 + $0x8] sm:$0xf]
  %v721 = vld [vmem:[%s7 + $0xc] sm:$0xf]
  %v722 = vld [vmem:[%s7 + $0x10] sm:$0xf]
  %v723 = vld [vmem:[%s7 + $0x14] sm:$0xf]
  %v724 = vld [vmem:[%s7 + $0x18] sm:$0xf]
  %v725 = vld [vmem:[%s7 + $0x1c] sm:$0xf]
  %v726 = vld [vmem:[%s7 + $0x20] sm:$0xf]
  %v727 = vld [vmem:[%s7 + $0x24] sm:$0xf]
  %v728 = vld [vmem:[%s7 + $0x28] sm:$0xf]
  %v729 = vld [vmem:[%s7 + $0x2c] sm:$0xf]
  %v730 = vld [vmem:[%s7 + $0x30] sm:$0xf]
  %v731 = vld [vmem:[%s7 + $0x34] sm:$0xf]
  %v732 = vld [vmem:[%s7 + $0x38] sm:$0xf]
  %v733 = vld [vmem:[%s7 + $0x3c] sm:$0xf]
  %v734 = vld [vmem:[%s8] sm:$0x1]
  %v736 = vlaneseq
  %v737 = vshrl.u32 %v736, 7
  %v738 = vsub.s32 0, %v737
  %v739 = vrot.slane %v734, %v738
  %v757 = vunpack.c.l.b16 %v718
  %v758 = vunpack.c.l.b16 %v719
  %v759 = vunpack.c.l.b16 %v720
  %v760 = vunpack.c.l.b16 %v721
  %v761 = vunpack.c.l.b16 %v722
  %v762 = vunpack.c.l.b16 %v723
  %v763 = vunpack.c.l.b16 %v724
  %v764 = vunpack.c.l.b16 %v725
  %v765 = vunpack.c.l.b16 %v726
  %v766 = vunpack.c.l.b16 %v727
  %v767 = vunpack.c.l.b16 %v728
  %v768 = vunpack.c.l.b16 %v729
  %v769 = vunpack.c.l.b16 %v730
  %v770 = vunpack.c.l.b16 %v731
  %v771 = vunpack.c.l.b16 %v732
  %v772 = vunpack.c.l.b16 %v733
  %v773 = vpack.c.b16 %v758, %v757
  %v774 = vpack.c.b16 %v760, %v759
  %v775 = vpack.c.b16 %v762, %v761
  %v776 = vpack.c.b16 %v764, %v763
  %v777 = vpack.c.b16 %v766, %v765
  %v778 = vpack.c.b16 %v768, %v767
  %v779 = vpack.c.b16 %v770, %v769
  %v780 = vpack.c.b16 %v772, %v771
  %789 = vmatprep.subr.bf16.mxu0 0
  %790 = vmatpush1.bf16.msra.mxu0 %v773
  %791 = vmatprep.subr.bf16.mxu0 0
  %792 = vmatpush1.bf16.msra.mxu0 %v774
  %793 = vmatprep.subr.bf16.mxu0 0
  %794 = vmatpush1.bf16.msra.mxu0 %v775
  %795 = vmatprep.subr.bf16.mxu0 0
  %796 = vmatpush1.bf16.msra.mxu0 %v776
  %797 = vmatprep.subr.bf16.mxu0 0
  %798 = vmatpush1.bf16.msra.mxu0 %v777
  %799 = vmatprep.subr.bf16.mxu0 0
  %800 = vmatpush1.bf16.msra.mxu0 %v778
  %801 = vmatprep.subr.bf16.mxu0 0
  %802 = vmatpush1.bf16.msra.mxu0 %v779
  %803 = vmatprep.subr.bf16.mxu0 0
  %804 = vmatpush1.bf16.msra.mxu0 %v780
  %805 = vmatprep.subr.bf16.mxu0 0
  %806 = vmatpush1.bf16.msra.mxu0 0
  %807 = vmatprep.subr.bf16.mxu0 0
  %808 = vmatpush1.bf16.msra.mxu0 0
  %809 = vmatprep.subr.bf16.mxu0 0
  %810 = vmatpush1.bf16.msra.mxu0 0
  %811 = vmatprep.subr.bf16.mxu0 0
  %812 = vmatpush1.bf16.msra.mxu0 0
  %813 = vmatprep.subr.bf16.mxu0 0
  %814 = vmatpush1.bf16.msra.mxu0 0
  %815 = vmatprep.subr.bf16.mxu0 0
  %816 = vmatpush1.bf16.msra.mxu0 0
  %817 = vmatprep.subr.bf16.mxu0 0
  %818 = vmatpush1.bf16.msra.mxu0 0
  %819 = vmatprep.subr.bf16.mxu0 0
  %820 = vmatpush1.bf16.msra.mxu0 0
  %821 = vmatprep.mubr.bf16.mxu0 0
  %822 = vmatmul.mubr.bf16.gmra.mrb[0].mxu0 %v717
  %v823 = vpop.f32.mrb[0].mxu0
  %v824 = vadd.f32 %v739, %v823
  %v825 = vpop.f32.mrb[0].mxu0
  %v826 = vpop.f32.mrb[0].mxu0
  %v827 = vpop.f32.mrb[0].mxu0
  %828 = vdwg.mxu0
  %v829 = vmax.f32 %v824, 0.0
  %v830 = vld [vmem:[%s1] sm:$0xf]
  %832 = vrot.lane.b32.xlu0 %v830, 64
  %v833 = vpop.permute.xlu0 %832
  %vm835 = vcmask 523264
  %v836 = vsel %vm835, %v829, %v833
  %v837 = vpack.c.bf16 %v836, %v836
  %v838 = vld [vmem:[%s9] sm:$0xf]
  %v839 = vld [vmem:[%s9 + $0x4] sm:$0xf]
  %v840 = vld [vmem:[%s9 + $0x8] sm:$0xf]
  %v841 = vld [vmem:[%s9 + $0xc] sm:$0xf]
  %v842 = vld [vmem:[%s9 + $0x10] sm:$0xf]
  %v843 = vld [vmem:[%s9 + $0x14] sm:$0xf]
  %v844 = vld [vmem:[%s9 + $0x18] sm:$0xf]
  %v845 = vld [vmem:[%s9 + $0x1c] sm:$0xf]
  %v846 = vld [vmem:[%s9 + $0x20] sm:$0x1]
  %v847 = vld [vmem:[%s10] sm:$0x1]
  %v849 = vlaneseq
  %v850 = vshrl.u32 %v849, 7
  %v851 = vsub.s32 0, %v850
  %v852 = vrot.slane %v847, %v851
  %v863 = vunpack.c.l.b16 %v838
  %v864 = vunpack.c.l.b16 %v839
  %v865 = vunpack.c.l.b16 %v840
  %v866 = vunpack.c.l.b16 %v841
  %v867 = vunpack.c.l.b16 %v842
  %v868 = vunpack.c.l.b16 %v843
  %v869 = vunpack.c.l.b16 %v844
  %v870 = vunpack.c.l.b16 %v845
  %v871 = vunpack.c.l.b16 %v846
  %v872 = vpack.c.b16 %v864, %v863
  %v873 = vpack.c.b16 %v866, %v865
  %v874 = vpack.c.b16 %v868, %v867
  %v875 = vpack.c.b16 %v870, %v869
  %v876 = vpack.c.b16 %v871, %v871
  %vm881 = vcmask 539648
  %v883 = vsel %vm881, %v837, 0
  %v886 = vsel %vm410, %v876, 0
  %888 = vmatprep.subr.bf16.mxu0 0
  %889 = vmatpush1.bf16.msra.mxu0 %v872
  %890 = vmatprep.subr.bf16.mxu0 0
  %891 = vmatpush1.bf16.msra.mxu0 %v873
  %892 = vmatprep.subr.bf16.mxu0 0
  %893 = vmatpush1.bf16.msra.mxu0 %v874
  %894 = vmatprep.subr.bf16.mxu0 0
  %895 = vmatpush1.bf16.msra.mxu0 %v875
  %896 = vmatprep.subr.bf16.mxu0 0
  %897 = vmatpush1.bf16.msra.mxu0 %v886
  %898 = vmatprep.subr.bf16.mxu0 0
  %899 = vmatpush1.bf16.msra.mxu0 0
  %900 = vmatprep.subr.bf16.mxu0 0
  %901 = vmatpush1.bf16.msra.mxu0 0
  %902 = vmatprep.subr.bf16.mxu0 0
  %903 = vmatpush1.bf16.msra.mxu0 0
  %904 = vmatprep.subr.bf16.mxu0 0
  %905 = vmatpush1.bf16.msra.mxu0 0
  %906 = vmatprep.subr.bf16.mxu0 0
  %907 = vmatpush1.bf16.msra.mxu0 0
  %908 = vmatprep.subr.bf16.mxu0 0
  %909 = vmatpush1.bf16.msra.mxu0 0
  %910 = vmatprep.subr.bf16.mxu0 0
  %911 = vmatpush1.bf16.msra.mxu0 0
  %912 = vmatprep.subr.bf16.mxu0 0
  %913 = vmatpush1.bf16.msra.mxu0 0
  %914 = vmatprep.subr.bf16.mxu0 0
  %915 = vmatpush1.bf16.msra.mxu0 0
  %916 = vmatprep.subr.bf16.mxu0 0
  %917 = vmatpush1.bf16.msra.mxu0 0
  %918 = vmatprep.subr.bf16.mxu0 0
  %919 = vmatpush1.bf16.msra.mxu0 0
  %920 = vmatprep.mubr.bf16.mxu0 0
  %921 = vmatmul.mubr.bf16.gmra.mrb[0].mxu0 %v883
  %v922 = vpop.f32.mrb[0].mxu0
  %v923 = vadd.f32 %v852, %v922
  %v924 = vpop.f32.mrb[0].mxu0
  %v925 = vpop.f32.mrb[0].mxu0
  %v926 = vpop.f32.mrb[0].mxu0
  %927 = vdwg.mxu0
  %v928 = vmax.f32 %v923, 0.0
  %v929 = vpack.c.bf16 %v928, %v928
  %v930 = vld [vmem:[%s11] sm:$0xf]
  %v931 = vld [vmem:[%s11 + $0x4] sm:$0xf]
  %v932 = vld [vmem:[%s11 + $0x8] sm:$0xf]
  %v933 = vld [vmem:[%s11 + $0xc] sm:$0xf]
  %v934 = vld [vmem:[%s11 + $0x10] sm:$0xf]
  %v935 = vld [vmem:[%s11 + $0x14] sm:$0xf]
  %v936 = vld [vmem:[%s11 + $0x18] sm:$0xf]
  %v937 = vld [vmem:[%s11 + $0x1c] sm:$0xf]
  %v938 = vld [vmem:[%s12] sm:$0x1]
  %v940 = vlaneseq
  %v941 = vshrl.u32 %v940, 7
  %v942 = vsub.s32 0, %v941
  %v943 = vrot.slane %v938, %v942
  %v953 = vunpack.c.l.b16 %v930
  %v954 = vunpack.c.l.b16 %v931
  %v955 = vunpack.c.l.b16 %v932
  %v956 = vunpack.c.l.b16 %v933
  %v957 = vunpack.c.l.b16 %v934
  %v958 = vunpack.c.l.b16 %v935
  %v959 = vunpack.c.l.b16 %v936
  %v960 = vunpack.c.l.b16 %v937
  %v961 = vpack.c.b16 %v954, %v953
  %v962 = vpack.c.b16 %v956, %v955
  %v963 = vpack.c.b16 %v958, %v957
  %v964 = vpack.c.b16 %v960, %v959
  %v970 = vsel %vm835, %v929, 0
  %972 = vmatprep.subr.bf16.mxu0 0
  %973 = vmatpush1.bf16.msra.mxu0 %v961
  %974 = vmatprep.subr.bf16.mxu0 0
  %975 = vmatpush1.bf16.msra.mxu0 %v962
  %976 = vmatprep.subr.bf16.mxu0 0
  %977 = vmatpush1.bf16.msra.mxu0 %v963
  %978 = vmatprep.subr.bf16.mxu0 0
  %979 = vmatpush1.bf16.msra.mxu0 %v964
  %980 = vmatprep.subr.bf16.mxu0 0
  %981 = vmatpush1.bf16.msra.mxu0 0
  %982 = vmatprep.subr.bf16.mxu0 0
  %983 = vmatpush1.bf16.msra.mxu0 0
  %984 = vmatprep.subr.bf16.mxu0 0
  %985 = vmatpush1.bf16.msra.mxu0 0
  %986 = vmatprep.subr.bf16.mxu0 0
  %987 = vmatpush1.bf16.msra.mxu0 0
  %988 = vmatprep.subr.bf16.mxu0 0
  %989 = vmatpush1.bf16.msra.mxu0 0
  %990 = vmatprep.subr.bf16.mxu0 0
  %991 = vmatpush1.bf16.msra.mxu0 0
  %992 = vmatprep.subr.bf16.mxu0 0
  %993 = vmatpush1.bf16.msra.mxu0 0
  %994 = vmatprep.subr.bf16.mxu0 0
  %995 = vmatpush1.bf16.msra.mxu0 0
  %996 = vmatprep.subr.bf16.mxu0 0
  %997 = vmatpush1.bf16.msra.mxu0 0
  %998 = vmatprep.subr.bf16.mxu0 0
  %999 = vmatpush1.bf16.msra.mxu0 0
  %1000 = vmatprep.subr.bf16.mxu0 0
  %1001 = vmatpush1.bf16.msra.mxu0 0
  %1002 = vmatprep.subr.bf16.mxu0 0
  %1003 = vmatpush1.bf16.msra.mxu0 0
  %1004 = vmatprep.mubr.bf16.mxu0 0
  %1005 = vmatmul.mubr.bf16.gmra.mrb[0].mxu0 %v970
  %v1006 = vpop.f32.mrb[0].mxu0
  %v1007 = vadd.f32 %v943, %v1006
  %v1008 = vpop.f32.mrb[0].mxu0
  %v1009 = vpop.f32.mrb[0].mxu0
  %v1010 = vpop.f32.mrb[0].mxu0
  %1011 = vdwg.mxu0
  %v1013 = vrot.slane %v1007, 2
  %1014 = vrot.lane.b32.xlu0 %v1013, 64
  %v1015 = vpop.permute.xlu0 %1014
  %v1017 = vsel %vm835, %v1007, %v1015
  %v1018 = vpack.c.bf16 %v1017, %v1017
  %v1019 = vld [vmem:[%s13] sm:$0xf]
  %v1020 = vld [vmem:[%s13 + $0x4] sm:$0xf]
  %v1021 = vld [vmem:[%s13 + $0x8] sm:$0xf]
  %v1022 = vld [vmem:[%s13 + $0xc] sm:$0xf]
  %v1023 = vld [vmem:[%s13 + $0x10] sm:$0xf]
  %v1024 = vld [vmem:[%s13 + $0x14] sm:$0xf]
  %v1025 = vld [vmem:[%s13 + $0x18] sm:$0xf]
  %v1026 = vld [vmem:[%s13 + $0x1c] sm:$0xf]
  %v1027 = vld [vmem:[%s13 + $0x20] sm:$0xf]
  %v1028 = vld [vmem:[%s13 + $0x24] sm:$0xf]
  %v1029 = vld [vmem:[%s13 + $0x28] sm:$0xf]
  %v1030 = vld [vmem:[%s13 + $0x2c] sm:$0xf]
  %v1031 = vld [vmem:[%s13 + $0x30] sm:$0xf]
  %v1032 = vld [vmem:[%s13 + $0x34] sm:$0xf]
  %v1033 = vld [vmem:[%s13 + $0x38] sm:$0xf]
  %v1034 = vld [vmem:[%s13 + $0x3c] sm:$0xf]
  %v1035 = vld [vmem:[%s14] sm:$0x1]
  %v1037 = vlaneseq
  %v1038 = vshrl.u32 %v1037, 7
  %v1039 = vsub.s32 0, %v1038
  %v1040 = vrot.slane %v1035, %v1039
  %v1058 = vunpack.c.l.b16 %v1019
  %v1059 = vunpack.c.l.b16 %v1020
  %v1060 = vunpack.c.l.b16 %v1021
  %v1061 = vunpack.c.l.b16 %v1022
  %v1062 = vunpack.c.l.b16 %v1023
  %v1063 = vunpack.c.l.b16 %v1024
  %v1064 = vunpack.c.l.b16 %v1025
  %v1065 = vunpack.c.l.b16 %v1026
  %v1066 = vunpack.c.l.b16 %v1027
  %v1067 = vunpack.c.l.b16 %v1028
  %v1068 = vunpack.c.l.b16 %v1029
  %v1069 = vunpack.c.l.b16 %v1030
  %v1070 = vunpack.c.l.b16 %v1031
  %v1071 = vunpack.c.l.b16 %v1032
  %v1072 = vunpack.c.l.b16 %v1033
  %v1073 = vunpack.c.l.b16 %v1034
  %v1074 = vpack.c.b16 %v1059, %v1058
  %v1075 = vpack.c.b16 %v1061, %v1060
  %v1076 = vpack.c.b16 %v1063, %v1062
  %v1077 = vpack.c.b16 %v1065, %v1064
  %v1078 = vpack.c.b16 %v1067, %v1066
  %v1079 = vpack.c.b16 %v1069, %v1068
  %v1080 = vpack.c.b16 %v1071, %v1070
  %v1081 = vpack.c.b16 %v1073, %v1072
  %1090 = vmatprep.subr.bf16.mxu0 0
  %1091 = vmatpush1.bf16.msra.mxu0 %v1074
  %1092 = vmatprep.subr.bf16.mxu0 0
  %1093 = vmatpush1.bf16.msra.mxu0 %v1075
  %1094 = vmatprep.subr.bf16.mxu0 0
  %1095 = vmatpush1.bf16.msra.mxu0 %v1076
  %1096 = vmatprep.subr.bf16.mxu0 0
  %1097 = vmatpush1.bf16.msra.mxu0 %v1077
  %1098 = vmatprep.subr.bf16.mxu0 0
  %1099 = vmatpush1.bf16.msra.mxu0 %v1078
  %1100 = vmatprep.subr.bf16.mxu0 0
  %1101 = vmatpush1.bf16.msra.mxu0 %v1079
  %1102 = vmatprep.subr.bf16.mxu0 0
  %1103 = vmatpush1.bf16.msra.mxu0 %v1080
  %1104 = vmatprep.subr.bf16.mxu0 0
  %1105 = vmatpush1.bf16.msra.mxu0 %v1081
  %1106 = vmatprep.subr.bf16.mxu0 0
  %1107 = vmatpush1.bf16.msra.mxu0 0
  %1108 = vmatprep.subr.bf16.mxu0 0
  %1109 = vmatpush1.bf16.msra.mxu0 0
  %1110 = vmatprep.subr.bf16.mxu0 0
  %1111 = vmatpush1.bf16.msra.mxu0 0
  %1112 = vmatprep.subr.bf16.mxu0 0
  %1113 = vmatpush1.bf16.msra.mxu0 0
  %1114 = vmatprep.subr.bf16.mxu0 0
  %1115 = vmatpush1.bf16.msra.mxu0 0
  %1116 = vmatprep.subr.bf16.mxu0 0
  %1117 = vmatpush1.bf16.msra.mxu0 0
  %1118 = vmatprep.subr.bf16.mxu0 0
  %1119 = vmatpush1.bf16.msra.mxu0 0
  %1120 = vmatprep.subr.bf16.mxu0 0
  %1121 = vmatpush1.bf16.msra.mxu0 0
  %1122 = vmatprep.mubr.bf16.mxu0 0
  %1123 = vmatmul.mubr.bf16.gmra.mrb[0].mxu0 %v1018
  %v1124 = vpop.f32.mrb[0].mxu0
  %v1125 = vadd.f32 %v1040, %v1124
  %v1126 = vpop.f32.mrb[0].mxu0
  %v1127 = vpop.f32.mrb[0].mxu0
  %v1128 = vpop.f32.mrb[0].mxu0
  %1129 = vdwg.mxu0
  %v1130 = vtanh.pop %v1125
  %v1131 = vpack.c.bf16 %v1130, %v1130
  %v1132 = vld [vmem:[%s15] sm:$0xf]
  %v1133 = vld [vmem:[%s15 + $0x4] sm:$0xf]
  %v1134 = vld [vmem:[%s15 + $0x8] sm:$0xf]
  %v1135 = vld [vmem:[%s15 + $0xc] sm:$0xf]
  %v1136 = vld [vmem:[%s15 + $0x10] sm:$0xf]
  %v1137 = vld [vmem:[%s15 + $0x14] sm:$0xf]
  %v1138 = vld [vmem:[%s15 + $0x18] sm:$0xf]
  %v1139 = vld [vmem:[%s15 + $0x1c] sm:$0xf]
  %v1140 = vld [vmem:[%s16] sm:$0x1]
  %v1142 = vlaneseq
  %v1143 = vshrl.u32 %v1142, 7
  %v1144 = vsub.s32 0, %v1143
  %v1145 = vrot.slane %v1140, %v1144
  %v1155 = vunpack.c.l.b16 %v1132
  %v1156 = vunpack.c.l.b16 %v1133
  %v1157 = vunpack.c.l.b16 %v1134
  %v1158 = vunpack.c.l.b16 %v1135
  %v1159 = vunpack.c.l.b16 %v1136
  %v1160 = vunpack.c.l.b16 %v1137
  %v1161 = vunpack.c.l.b16 %v1138
  %v1162 = vunpack.c.l.b16 %v1139
  %v1163 = vpack.c.b16 %v1156, %v1155
  %v1164 = vpack.c.b16 %v1158, %v1157
  %v1165 = vpack.c.b16 %v1160, %v1159
  %v1166 = vpack.c.b16 %v1162, %v1161
  %v1172 = vsel %vm835, %v1131, 0
  %1174 = vmatprep.subr.bf16.mxu0 0
  %1175 = vmatpush1.bf16.msra.mxu0 %v1163
  %1176 = vmatprep.subr.bf16.mxu0 0
  %1177 = vmatpush1.bf16.msra.mxu0 %v1164
  %1178 = vmatprep.subr.bf16.mxu0 0
  %1179 = vmatpush1.bf16.msra.mxu0 %v1165
  %1180 = vmatprep.subr.bf16.mxu0 0
  %1181 = vmatpush1.bf16.msra.mxu0 %v1166
  %1182 = vmatprep.subr.bf16.mxu0 0
  %1183 = vmatpush1.bf16.msra.mxu0 0
  %1184 = vmatprep.subr.bf16.mxu0 0
  %1185 = vmatpush1.bf16.msra.mxu0 0
  %1186 = vmatprep.subr.bf16.mxu0 0
  %1187 = vmatpush1.bf16.msra.mxu0 0
  %1188 = vmatprep.subr.bf16.mxu0 0
  %1189 = vmatpush1.bf16.msra.mxu0 0
  %1190 = vmatprep.subr.bf16.mxu0 0
  %1191 = vmatpush1.bf16.msra.mxu0 0
  %1192 = vmatprep.subr.bf16.mxu0 0
  %1193 = vmatpush1.bf16.msra.mxu0 0
  %1194 = vmatprep.subr.bf16.mxu0 0
  %1195 = vmatpush1.bf16.msra.mxu0 0
  %1196 = vmatprep.subr.bf16.mxu0 0
  %1197 = vmatpush1.bf16.msra.mxu0 0
  %1198 = vmatprep.subr.bf16.mxu0 0
  %1199 = vmatpush1.bf16.msra.mxu0 0
  %1200 = vmatprep.subr.bf16.mxu0 0
  %1201 = vmatpush1.bf16.msra.mxu0 0
  %1202 = vmatprep.subr.bf16.mxu0 0
  %1203 = vmatpush1.bf16.msra.mxu0 0
  %1204 = vmatprep.subr.bf16.mxu0 0
  %1205 = vmatpush1.bf16.msra.mxu0 0
  %1206 = vmatprep.mubr.bf16.mxu0 0
  %1207 = vmatmul.mubr.bf16.gmra.mrb[0].mxu0 %v1172
  %v1208 = vpop.f32.mrb[0].mxu0
  %v1209 = vadd.f32 %v1145, %v1208
  %v1210 = vpop.f32.mrb[0].mxu0
  %v1211 = vpop.f32.mrb[0].mxu0
  %v1212 = vpop.f32.mrb[0].mxu0
  %1213 = vdwg.mxu0
  %vm1214 = vcmask 25600
  %v1215 = vsel %vm1214, %v1209, -inf
  %1216 = vmax.xlane.f32.xlu0 %v1215
  %v1217 = vpop.xlane.xlu0 %1216
  %v1218 = vsub.f32 %v1209, %v1217
  %v1219 = vmul.f32 %v1218, 1.442695
  %v1220 = vpow.pop %v1219
  %v1221 = vsel %vm1214, %v1220, 0.0
  %1222 = vadd.xlane.f32.xlu0 %v1221
  %v1223 = vpop.xlane.xlu0 %1222
  %v1224 = vlog2.pop %v1223
  %v1225 = vmul.f32 %v1224, 0.6931472
  %v1226 = vsub.f32 %v1218, %v1225
  %v1227 = vld [vmem:[%s2] sm:$0x3]
  %1229 = vrot.lane.b32.xlu0 %v1227, 64
  %v1230 = vpop.permute.xlu0 %1229
  %v1232 = vsel %vm835, %v1007, %v1230
  %v1233 = vpack.c.bf16 %v1232, %v1232
  %v1234 = vld [vmem:[%s17] sm:$0xf]
  %v1235 = vld [vmem:[%s17 + $0x4] sm:$0xf]
  %v1236 = vld [vmem:[%s17 + $0x8] sm:$0xf]
  %v1237 = vld [vmem:[%s17 + $0xc] sm:$0xf]
  %v1238 = vld [vmem:[%s17 + $0x10] sm:$0xf]
  %v1239 = vld [vmem:[%s17 + $0x14] sm:$0xf]
  %v1240 = vld [vmem:[%s17 + $0x18] sm:$0xf]
  %v1241 = vld [vmem:[%s17 + $0x1c] sm:$0xf]
  %v1242 = vld [vmem:[%s17 + $0x20] sm:$0x3]
  %v1243 = vld [vmem:[%s18] sm:$0x1]
  %v1245 = vlaneseq
  %v1246 = vshrl.u32 %v1245, 7
  %v1247 = vsub.s32 0, %v1246
  %v1248 = vrot.slane %v1243, %v1247
  %v1259 = vunpack.c.l.b16 %v1234
  %v1260 = vunpack.c.l.b16 %v1235
  %v1261 = vunpack.c.l.b16 %v1236
  %v1262 = vunpack.c.l.b16 %v1237
  %v1263 = vunpack.c.l.b16 %v1238
  %v1264 = vunpack.c.l.b16 %v1239
  %v1265 = vunpack.c.l.b16 %v1240
  %v1266 = vunpack.c.l.b16 %v1241
  %v1267 = vunpack.c.l.b16 %v1242
  %v1268 = vpack.c.b16 %v1260, %v1259
  %v1269 = vpack.c.b16 %v1262, %v1261
  %v1270 = vpack.c.b16 %v1264, %v1263
  %v1271 = vpack.c.b16 %v1266, %v1265
  %v1272 = vpack.c.b16 %v1267, %v1267
  %vm1277 = vcmask 556032
  %v1279 = vsel %vm1277, %v1233, 0
  %v1282 = vsel %vm411, %v1272, 0
  %1284 = vmatprep.subr.bf16.mxu0 0
  %1285 = vmatpush1.bf16.msra.mxu0 %v1268
  %1286 = vmatprep.subr.bf16.mxu0 0
  %1287 = vmatpush1.bf16.msra.mxu0 %v1269
  %1288 = vmatprep.subr.bf16.mxu0 0
  %1289 = vmatpush1.bf16.msra.mxu0 %v1270
  %1290 = vmatprep.subr.bf16.mxu0 0
  %1291 = vmatpush1.bf16.msra.mxu0 %v1271
  %1292 = vmatprep.subr.bf16.mxu0 0
  %1293 = vmatpush1.bf16.msra.mxu0 %v1282
  %1294 = vmatprep.subr.bf16.mxu0 0
  %1295 = vmatpush1.bf16.msra.mxu0 0
  %1296 = vmatprep.subr.bf16.mxu0 0
  %1297 = vmatpush1.bf16.msra.mxu0 0
  %1298 = vmatprep.subr.bf16.mxu0 0
  %1299 = vmatpush1.bf16.msra.mxu0 0
  %1300 = vmatprep.subr.bf16.mxu0 0
  %1301 = vmatpush1.bf16.msra.mxu0 0
  %1302 = vmatprep.subr.bf16.mxu0 0
  %1303 = vmatpush1.bf16.msra.mxu0 0
  %1304 = vmatprep.subr.bf16.mxu0 0
  %1305 = vmatpush1.bf16.msra.mxu0 0
  %1306 = vmatprep.subr.bf16.mxu0 0
  %1307 = vmatpush1.bf16.msra.mxu0 0
  %1308 = vmatprep.subr.bf16.mxu0 0
  %1309 = vmatpush1.bf16.msra.mxu0 0
  %1310 = vmatprep.subr.bf16.mxu0 0
  %1311 = vmatpush1.bf16.msra.mxu0 0
  %1312 = vmatprep.subr.bf16.mxu0 0
  %1313 = vmatpush1.bf16.msra.mxu0 0
  %1314 = vmatprep.subr.bf16.mxu0 0
  %1315 = vmatpush1.bf16.msra.mxu0 0
  %1316 = vmatprep.mubr.bf16.mxu0 0
  %1317 = vmatmul.mubr.bf16.gmra.mrb[0].mxu0 %v1279
  %v1318 = vpop.f32.mrb[0].mxu0
  %v1319 = vadd.f32 %v1248, %v1318
  %v1320 = vpop.f32.mrb[0].mxu0
  %v1321 = vpop.f32.mrb[0].mxu0
  %v1322 = vpop.f32.mrb[0].mxu0
  %1323 = vdwg.mxu0
  %v1324 = vtanh.pop %v1319
  %v1325 = vpack.c.bf16 %v1324, %v1324
  %v1326 = vld [vmem:[%s19] sm:$0xf]
  %v1327 = vld [vmem:[%s19 + $0x4] sm:$0xf]
  %v1328 = vld [vmem:[%s19 + $0x8] sm:$0xf]
  %v1329 = vld [vmem:[%s19 + $0xc] sm:$0xf]
  %v1330 = vld [vmem:[%s19 + $0x10] sm:$0xf]
  %v1331 = vld [vmem:[%s19 + $0x14] sm:$0xf]
  %v1332 = vld [vmem:[%s19 + $0x18] sm:$0xf]
  %v1333 = vld [vmem:[%s19 + $0x1c] sm:$0xf]
  %v1334 = vld [vmem:[%s20] sm:$0x1]
  %v1336 = vlaneseq
  %v1337 = vshrl.u32 %v1336, 7
  %v1338 = vsub.s32 0, %v1337
  %v1339 = vrot.slane %v1334, %v1338
  %v1349 = vunpack.c.l.b16 %v1326
  %v1350 = vunpack.c.l.b16 %v1327
  %v1351 = vunpack.c.l.b16 %v1328
  %v1352 = vunpack.c.l.b16 %v1329
  %v1353 = vunpack.c.l.b16 %v1330
  %v1354 = vunpack.c.l.b16 %v1331
  %v1355 = vunpack.c.l.b16 %v1332
  %v1356 = vunpack.c.l.b16 %v1333
  %v1357 = vpack.c.b16 %v1350, %v1349
  %v1358 = vpack.c.b16 %v1352, %v1351
  %v1359 = vpack.c.b16 %v1354, %v1353
  %v1360 = vpack.c.b16 %v1356, %v1355
  %v1366 = vsel %vm835, %v1325, 0
  %1368 = vmatprep.subr.bf16.mxu0 0
  %1369 = vmatpush1.bf16.msra.mxu0 %v1357
  %1370 = vmatprep.subr.bf16.mxu0 0
  %1371 = vmatpush1.bf16.msra.mxu0 %v1358
  %1372 = vmatprep.subr.bf16.mxu0 0
  %1373 = vmatpush1.bf16.msra.mxu0 %v1359
  %1374 = vmatprep.subr.bf16.mxu0 0
  %1375 = vmatpush1.bf16.msra.mxu0 %v1360
  %1376 = vmatprep.subr.bf16.mxu0 0
  %1377 = vmatpush1.bf16.msra.mxu0 0
  %1378 = vmatprep.subr.bf16.mxu0 0
  %1379 = vmatpush1.bf16.msra.mxu0 0
  %1380 = vmatprep.subr.bf16.mxu0 0
  %1381 = vmatpush1.bf16.msra.mxu0 0
  %1382 = vmatprep.subr.bf16.mxu0 0
  %1383 = vmatpush1.bf16.msra.mxu0 0
  %1384 = vmatprep.subr.bf16.mxu0 0
  %1385 = vmatpush1.bf16.msra.mxu0 0
  %1386 = vmatprep.subr.bf16.mxu0 0
  %1387 = vmatpush1.bf16.msra.mxu0 0
  %1388 = vmatprep.subr.bf16.mxu0 0
  %1389 = vmatpush1.bf16.msra.mxu0 0
  %1390 = vmatprep.subr.bf16.mxu0 0
  %1391 = vmatpush1.bf16.msra.mxu0 0
  %1392 = vmatprep.subr.bf16.mxu0 0
  %1393 = vmatpush1.bf16.msra.mxu0 0
  %1394 = vmatprep.subr.bf16.mxu0 0
  %1395 = vmatpush1.bf16.msra.mxu0 0
  %1396 = vmatprep.subr.bf16.mxu0 0
  %1397 = vmatpush1.bf16.msra.mxu0 0
  %1398 = vmatprep.subr.bf16.mxu0 0
  %1399 = vmatpush1.bf16.msra.mxu0 0
  %1400 = vmatprep.mubr.bf16.mxu0 0
  %1401 = vmatmul.mubr.bf16.gmra.mrb[0].mxu0 %v1366
  %v1402 = vpop.f32.mrb[0].mxu0
  %v1403 = vadd.f32 %v1339, %v1402
  %v1404 = vpop.f32.mrb[0].mxu0
  %v1405 = vpop.f32.mrb[0].mxu0
  %v1406 = vpop.f32.mrb[0].mxu0
  %1407 = vdwg.mxu0
  %1409 = vrot.lane.b32.xlu0 %v1226, 64
  %v1410 = vpop.permute.xlu0 %1409
  %v1412 = vsel %vm835, %v1403, %v1410
  %v1413 = vsel %vm1277, %v1412, 0.0
  %1414 = vst [vmem:[%s21] sm:$0x3] %v1413
  // Predicated region
  $region86: #{icm_forward.1} parent=0 // pred_check
    _
  $region87: #{icm_forward.1} parent=0 // pred_check_branch
    %1416 = sbr.rel (0) target = $region89
  $region88: #{icm_forward.1} parent=0 // pred_region
    _
  $region89: #{icm_forward.1} parent=0 // pred_fallthru
    _
  // Predicated region
  $region90: #{icm_forward.1} parent=0 // pred_check
    _
  $region91: #{icm_forward.1} parent=0 // pred_check_branch
    %1418 = sbr.rel (0) target = $region93
  $region92: #{icm_forward.1} parent=0 // pred_region
    _
  $region93: #{icm_forward.1} parent=0 // pred_fallthru
    _

</llo_original>
